<compile_context>
chip_gen: v6e
topology: v6e:2x2x1
jax: 0.10.0
libtpu: 0.0.40
codegen_flags: <defaults>
</compile_context>

<pallas_src>
import functools

import jax
import jax.numpy as jnp
from jax.experimental import pallas as pl
from jax.experimental.pallas import tpu as pltpu

D_IN = 59          # true input feature count (from the module)
D_IN_PAD = 128     # zero-padded contraction dim (full lane width)
H1 = 1024
H2 = 512
D_OUT = 1


def _round_up(n, m):
    return ((n + m - 1) // m) * m


def _critic_kernel(x_ref, w1_ref, b1_ref, w2_ref, b2_ref, w3_ref, b3_ref,
                   o_ref, *, tanh_bf16):
    """One batch tile: (TB, 128) bf16 -> (TB, 1) f32 value column."""
    x = x_ref[...]                                            # (TB, 128) bf16

    # Layer 1: MXU matmul (bf16 in, f32 accumulate), bias add in f32.
    h1 = jnp.dot(x, w1_ref[...],
                 preferred_element_type=jnp.float32) + b1_ref[...]
    if tanh_bf16:
        h1 = jnp.tanh(h1.astype(jnp.bfloat16))    # bf16 EUP (v6e/v7x)
    else:
        h1 = jnp.tanh(h1).astype(jnp.bfloat16)    # f32 EUP (v5e), cast for MXU

    # Layer 2: MXU matmul, bias add in f32.
    h2 = jnp.dot(h1, w2_ref[...],
                 preferred_element_type=jnp.float32) + b2_ref[...]
    if tanh_bf16:
        h2 = jnp.tanh(h2.astype(jnp.bfloat16))
    else:
        h2 = jnp.tanh(h2)

    # Layer 3 (512 -> 1): VPU multiply + XLU cross-lane reduce (f32 accumulate)
    # instead of an N=1 matmul; hidden under the MXU slots.
    h2f = h2.astype(jnp.float32)
    v = jnp.sum(h2f * w3_ref[...], axis=-1, keepdims=True) + b3_ref[0]

    o_ref[...] = v.astype(o_ref.dtype)                        # compact (TB, 1)


@functools.partial(jax.jit, static_argnames=("block_b", "tanh_bf16"))
def critic_forward(x, params, *, block_b=1024, tanh_bf16=True):
    """x: (B, 59) float32.  Returns v_s: (B, 1) float32."""
    w1, b1, w2, b2, w3, b3 = params
    B = x.shape[0]

    # Batch tile: multiple of 16 (bf16 sublane packing), aim for >= 2 grid
    # steps so both v7x TensorCores get work, capped at block_b.
    tb = min(block_b, _round_up(max(-(-B // 2), 1), 16))
    b_pad = _round_up(B, tb)
    num_tiles = b_pad // tb

    # Wrapper-side layout prep (done once, outside the hot loop):
    #  - zero-pad batch to a tile multiple and features 59 -> 128, cast to bf16
    #  - zero-pad w1's contraction dim to 128, cast matmul weights to bf16
    #  - reshape biases; b3 becomes an SMEM scalar
    x_p = jnp.pad(x.astype(jnp.float32),
                  ((0, b_pad - B), (0, D_IN_PAD - D_IN))).astype(jnp.bfloat16)
    w1_p = jnp.pad(w1, ((0, D_IN_PAD - D_IN), (0, 0))).astype(jnp.bfloat16)
    w2_c = w2.astype(jnp.bfloat16)
    w3_row = w3.reshape(1, H2).astype(jnp.float32)   # f32 for the VPU reduce
    b1_r = b1.reshape(1, H1).astype(jnp.float32)
    b2_r = b2.reshape(1, H2).astype(jnp.float32)
    b3_s = b3.reshape(1).astype(jnp.float32)

    flops = 2 * b_pad * (D_IN_PAD * H1 + H1 * H2 + H2)
    transcendentals = b_pad * (H1 + H2)
    bytes_accessed = int(
        x_p.size * 2
        + w1_p.size * 2 + w2_c.size * 2
        + b1_r.size * 4 + b2_r.size * 4 + w3_row.size * 4 + b3_s.size * 4
        + b_pad * D_OUT * 4)

    kernel = functools.partial(_critic_kernel, tanh_bf16=tanh_bf16)

    out = pl.pallas_call(
        kernel,
        out_shape=jax.ShapeDtypeStruct((b_pad, D_OUT), jnp.float32),
        grid=(num_tiles,),
        in_specs=[
            # activations: advance along the batch grid axis
            pl.BlockSpec((tb, D_IN_PAD), lambda i: (i, 0)),
            # weights / biases: constant block index -> stay VMEM-resident
            pl.BlockSpec((D_IN_PAD, H1), lambda i: (0, 0)),
            pl.BlockSpec((1, H1), lambda i: (0, 0)),
            pl.BlockSpec((H1, H2), lambda i: (0, 0)),
            pl.BlockSpec((1, H2), lambda i: (0, 0)),
            pl.BlockSpec((1, H2), lambda i: (0, 0)),
            # scalar bias in SMEM (a (1,1) VMEM block would waste a padded tile)
            pl.BlockSpec(memory_space=pltpu.MemorySpace.SMEM),
        ],
        out_specs=pl.BlockSpec((tb, D_OUT), lambda i: (i, 0)),
        compiler_params=pltpu.CompilerParams(
            dimension_semantics=("parallel",),      # shard batch over TCs (v7x)
            vmem_limit_bytes=48 * 1024 * 1024,      # fits v7x 64 MiB per-TC VMEM
        ),
        cost_estimate=pl.CostEstimate(
            flops=flops,
            transcendentals=transcendentals,
            bytes_accessed=bytes_accessed,
        ),
    )(x_p, w1_p, b1_r, w2_c, b2_r, w3_row, b3_s)

    # Slice back to the logical (B, 1) result (padded rows dropped).
    return out[:B]


def _tanh_bf16_default():
    """bf16 tanh on v6e/v7x (bf16 EUP); f32 tanh on v5-class chips."""
    try:
        kind = jax.devices()[0].device_kind.lower()
    except Exception:
        return True
    return "v5" not in kind


def init_params(key):
    """Deterministic synthetic parameters, stored as (in, out) / (out,)."""
    k1, k2, k3 = jax.random.split(key, 3)
    w1 = jax.random.normal(k1, (D_IN, H1), jnp.float32) / jnp.sqrt(D_IN)
    b1 = jnp.zeros((H1,), jnp.float32)
    w2 = jax.random.normal(k2, (H1, H2), jnp.float32) / jnp.sqrt(H1)
    b2 = jnp.zeros((H2,), jnp.float32)
    w3 = jax.random.normal(k3, (H2, D_OUT), jnp.float32) / jnp.sqrt(H2)
    b3 = jnp.zeros((D_OUT,), jnp.float32)
    return w1, b1, w2, b2, w3, b3


def _reference(x, params, *, tanh_bf16):
    """Pure-JAX reference mirroring the kernel's precision choices
    (bf16 matmul inputs, f32 accumulate, tanh dtype matching the kernel)."""
    w1, b1, w2, b2, w3, b3 = params
    h1 = jnp.dot(x.astype(jnp.bfloat16), w1.astype(jnp.bfloat16),
                 preferred_element_type=jnp.float32) + b1
    h1 = (jnp.tanh(h1.astype(jnp.bfloat16)) if tanh_bf16
          else jnp.tanh(h1).astype(jnp.bfloat16))
    h2 = jnp.dot(h1, w2.astype(jnp.bfloat16),
                 preferred_element_type=jnp.float32) + b2
    h2 = jnp.tanh(h2.astype(jnp.bfloat16)) if tanh_bf16 else jnp.tanh(h2)
    return (jnp.sum(h2.astype(jnp.float32) * w3.reshape(1, H2),
                    axis=-1, keepdims=True) + b3)


if __name__ == "__main__":
    key = jax.random.PRNGKey(0)
    kx, kp = jax.random.split(key)
    B = 8
    x = jax.random.normal(kx, (B, D_IN), jnp.float32)
    params = init_params(kp)

    tanh_bf16 = _tanh_bf16_default()
    v = critic_forward(x, params, tanh_bf16=tanh_bf16)
    jax.block_until_ready(v)

    ref = _reference(x, params, tanh_bf16=tanh_bf16)
    assert v.shape == (B, D_OUT)
    assert jnp.allclose(v, ref, atol=2e-2, rtol=2e-2), "mismatch vs reference"
    print("KERNEL_OK")
</pallas_src>

<mosaic_0001>
module attributes {stable_mosaic.version = 11 : i64} {
  func.func @_critic_kernel(%arg0: i32, %arg1: memref<16x128xbf16, #tpu.memory_space<vmem>>, %arg2: memref<128x1024xbf16, #tpu.memory_space<vmem>>, %arg3: memref<1x1024xf32, #tpu.memory_space<vmem>>, %arg4: memref<1024x512xbf16, #tpu.memory_space<vmem>>, %arg5: memref<1x512xf32, #tpu.memory_space<vmem>>, %arg6: memref<1x512xf32, #tpu.memory_space<vmem>>, %arg7: memref<1xf32, #tpu.memory_space<smem>>, %arg8: memref<16x1xf32, #tpu.memory_space<vmem>>) attributes {dimension_semantics = [#tpu.dimension_semantics<parallel>], iteration_bounds = array<i64: 1>, scalar_prefetch = 0 : i64, scratch_operands = 0 : i64, tpu.core_type = #tpu.core_type<tc>, window_params = [{transform_indices = @transform_0, window_bounds = array<i64: 16, 128>}, {pipeline_mode = #tpu.pipeline_mode<synchronous>, transform_indices = @transform_1, window_bounds = array<i64: 128, 1024>}, {pipeline_mode = #tpu.pipeline_mode<synchronous>, transform_indices = @transform_2, window_bounds = array<i64: 1, 1024>}, {pipeline_mode = #tpu.pipeline_mode<synchronous>, transform_indices = @transform_3, window_bounds = array<i64: 1024, 512>}, {pipeline_mode = #tpu.pipeline_mode<synchronous>, transform_indices = @transform_4, window_bounds = array<i64: 1, 512>}, {pipeline_mode = #tpu.pipeline_mode<synchronous>, transform_indices = @transform_5, window_bounds = array<i64: 1, 512>}, {transform_indices = @transform_6, window_bounds = array<i64: 1>}, {transform_indices = @transform_7, window_bounds = array<i64: 16, 1>}]} {
    %c0 = arith.constant 0 : index
    %c0_0 = arith.constant 0 : index
    %0 = vector.load %arg1[%c0, %c0_0] : memref<16x128xbf16, #tpu.memory_space<vmem>>, vector<16x128xbf16>
    %c0_1 = arith.constant 0 : index
    %c0_2 = arith.constant 0 : index
    %1 = vector.load %arg2[%c0_1, %c0_2] : memref<128x1024xbf16, #tpu.memory_space<vmem>>, vector<128x1024xbf16>
    %cst = arith.constant dense<0.000000e+00> : vector<16x1024xf32>
    %2 = tpu.matmul %0, %1, %cst {dimension_numbers = #tpu.dot_dimension_numbers<[1], [0], [0], [1], [0, 0, 1, 1], [], []>} : vector<16x128xbf16>, vector<128x1024xbf16>, vector<16x1024xf32> -> vector<16x1024xf32>
    %c0_3 = arith.constant 0 : index
    %c0_4 = arith.constant 0 : index
    %3 = vector.load %arg3[%c0_3, %c0_4] : memref<1x1024xf32, #tpu.memory_space<vmem>>, vector<1x1024xf32>
    %4 = vector.broadcast %3 : vector<1x1024xf32> to vector<16x1024xf32>
    %5 = arith.addf %2, %4 : vector<16x1024xf32>
    %6 = arith.truncf %5 : vector<16x1024xf32> to vector<16x1024xbf16>
    %7 = math.tanh %6 : vector<16x1024xbf16>
    %c0_5 = arith.constant 0 : index
    %c0_6 = arith.constant 0 : index
    %8 = vector.load %arg4[%c0_5, %c0_6] : memref<1024x512xbf16, #tpu.memory_space<vmem>>, vector<1024x512xbf16>
    %cst_7 = arith.constant dense<0.000000e+00> : vector<16x512xf32>
    %9 = tpu.matmul %7, %8, %cst_7 {dimension_numbers = #tpu.dot_dimension_numbers<[1], [0], [0], [1], [0, 0, 1, 1], [], []>} : vector<16x1024xbf16>, vector<1024x512xbf16>, vector<16x512xf32> -> vector<16x512xf32>
    %c0_8 = arith.constant 0 : index
    %c0_9 = arith.constant 0 : index
    %10 = vector.load %arg5[%c0_8, %c0_9] : memref<1x512xf32, #tpu.memory_space<vmem>>, vector<1x512xf32>
    %11 = vector.broadcast %10 : vector<1x512xf32> to vector<16x512xf32>
    %12 = arith.addf %9, %11 : vector<16x512xf32>
    %13 = arith.truncf %12 : vector<16x512xf32> to vector<16x512xbf16>
    %14 = math.tanh %13 : vector<16x512xbf16>
    %15 = arith.extf %14 : vector<16x512xbf16> to vector<16x512xf32>
    %c0_10 = arith.constant 0 : index
    %c0_11 = arith.constant 0 : index
    %16 = vector.load %arg6[%c0_10, %c0_11] : memref<1x512xf32, #tpu.memory_space<vmem>>, vector<1x512xf32>
    %17 = vector.broadcast %16 : vector<1x512xf32> to vector<16x512xf32>
    %18 = arith.mulf %15, %17 : vector<16x512xf32>
    %cst_12 = arith.constant dense<0.000000e+00> : vector<16xf32>
    %19 = vector.multi_reduction <add>, %18, %cst_12 [1] : vector<16x512xf32> to vector<16xf32>
    %20 = vector.shape_cast %19 : vector<16xf32> to vector<16x1xf32>
    %c0_13 = arith.constant 0 : index
    %21 = memref.load %arg7[%c0_13] : memref<1xf32, #tpu.memory_space<smem>>
    %22 = vector.broadcast %21 : f32 to vector<16x1xf32>
    %23 = arith.addf %20, %22 : vector<16x1xf32>
    %c0_14 = arith.constant 0 : index
    %c0_15 = arith.constant 0 : index
    %24 = vector.load %arg8[%c0_14, %c0_15] : memref<16x1xf32, #tpu.memory_space<vmem>>, vector<16x1xf32>
    tpu.vector_store %arg8[%c0_14, %c0_15], %23 {strides = array<i32>} : memref<16x1xf32, #tpu.memory_space<vmem>>, vector<16x1xf32>,
    return
  }
  func.func @transform_0(%arg0: i32) -> (i32, i32) {
    %c0_i32 = arith.constant 0 : i32
    %c0_i32_0 = arith.constant 0 : i32
    return %arg0, %c0_i32 : i32, i32
  }
  func.func @transform_1(%arg0: i32) -> (i32, i32) {
    %c0_i32 = arith.constant 0 : i32
    %c0_i32_0 = arith.constant 0 : i32
    %c0_i32_1 = arith.constant 0 : i32
    return %c0_i32, %c0_i32_0 : i32, i32
  }
  func.func @transform_2(%arg0: i32) -> (i32, i32) {
    %c0_i32 = arith.constant 0 : i32
    %c0_i32_0 = arith.constant 0 : i32
    %c0_i32_1 = arith.constant 0 : i32
    return %c0_i32, %c0_i32_0 : i32, i32
  }
  func.func @transform_3(%arg0: i32) -> (i32, i32) {
    %c0_i32 = arith.constant 0 : i32
    %c0_i32_0 = arith.constant 0 : i32
    %c0_i32_1 = arith.constant 0 : i32
    return %c0_i32, %c0_i32_0 : i32, i32
  }
  func.func @transform_4(%arg0: i32) -> (i32, i32) {
    %c0_i32 = arith.constant 0 : i32
    %c0_i32_0 = arith.constant 0 : i32
    %c0_i32_1 = arith.constant 0 : i32
    return %c0_i32, %c0_i32_0 : i32, i32
  }
  func.func @transform_5(%arg0: i32) -> (i32, i32) {
    %c0_i32 = arith.constant 0 : i32
    %c0_i32_0 = arith.constant 0 : i32
    %c0_i32_1 = arith.constant 0 : i32
    return %c0_i32, %c0_i32_0 : i32, i32
  }
  func.func @transform_6(%arg0: i32) -> i32 {
    %c0_i32 = arith.constant 0 : i32
    %c0_i32_0 = arith.constant 0 : i32
    return %c0_i32 : i32
  }
  func.func @transform_7(%arg0: i32) -> (i32, i32) {
    %c0_i32 = arith.constant 0 : i32
    %c0_i32_0 = arith.constant 0 : i32
    return %arg0, %c0_i32 : i32, i32
  }
}

</mosaic_0001>

<llo_original>
// kernel: critic_forward.1
$region0: #{critic_forward.1}
  #allocation0 [shape = 'u32[]', space=smem, size = 0x4, offset = 0x4, fixed_abs, tag = 'smem constant byte address 0x4 - core index']
  #allocation1 [shape = 'u32[144,128]{1,0:T(1,128)}', space=vmem, size = 0x12000, scoped, tag = 'internal scratch']
  #allocation2 [shape = 'f32[1]{0:T(128)S(6)}', space=smem, size = 0x200, scoped, tag = 'scoped memory for critic_forward.1']
  %s0 = inlined_call_operand.vmem [shape: bf16[16,128], index: 0, kind: input, shape index: {}]
  %s1 = inlined_call_operand.vmem [shape: bf16[128,1024], index: 1, kind: input, shape index: {}]
  %s2 = inlined_call_operand.vmem [shape: f32[1,1024], index: 2, kind: input, shape index: {}]
  %s3 = inlined_call_operand.vmem [shape: bf16[1024,512], index: 3, kind: input, shape index: {}]
  %s4 = inlined_call_operand.vmem [shape: f32[1,512], index: 4, kind: input, shape index: {}]
  %s5 = inlined_call_operand.vmem [shape: f32[1,512], index: 5, kind: input, shape index: {}]
  %s6 = inlined_call_operand.<no memory space> [shape: f32[1], index: 6, kind: input, shape index: {}]
  %s7 = inlined_call_operand.vmem [shape: f32[16,1], index: 7, kind: output, shape index: {}]
  %s8 = sld [smem:[#allocation0]]
  $region38: #{critic_forward.1} parent=0
    _
  %s10 = ssub.s32 1, %s8
  %s11 = scalar_select 0, %s10, %s8
  %12 = sst [smem:[#allocation2]] %s6
  // Predicated region
  $region2: #{critic_forward.1} parent=0 // pred_check
    _
  $region3: #{critic_forward.1} parent=0 // pred_check_branch
    %14 = sbr.rel (0) target = $region5
  $region4: #{critic_forward.1} parent=0 // pred_region
    _
  $region5: #{critic_forward.1} parent=0 // pred_fallthru
    _
  // Predicated region
  $region6: #{critic_forward.1} parent=0 // pred_check
    _
  $region7: #{critic_forward.1} parent=0 // pred_check_branch
    %16 = sbr.rel (0) target = $region9
  $region8: #{critic_forward.1} parent=0 // pred_region
    _
  $region9: #{critic_forward.1} parent=0 // pred_fallthru
    _
  // Predicated region
  $region10: #{critic_forward.1} parent=0 // pred_check
    _
  $region11: #{critic_forward.1} parent=0 // pred_check_branch
    %18 = sbr.rel (0) target = $region13
  $region12: #{critic_forward.1} parent=0 // pred_region
    _
  $region13: #{critic_forward.1} parent=0 // pred_fallthru
    _
  // Predicated region
  $region14: #{critic_forward.1} parent=0 // pred_check
    _
  $region15: #{critic_forward.1} parent=0 // pred_check_branch
    %20 = sbr.rel (0) target = $region17
  $region16: #{critic_forward.1} parent=0 // pred_region
    _
  $region17: #{critic_forward.1} parent=0 // pred_fallthru
    _
  // Predicated region
  $region18: #{critic_forward.1} parent=0 // pred_check
    _
  $region19: #{critic_forward.1} parent=0 // pred_check_branch
    %22 = sbr.rel (0) target = $region21
  $region20: #{critic_forward.1} parent=0 // pred_region
    _
  $region21: #{critic_forward.1} parent=0 // pred_fallthru
    _
  // Predicated region
  $region22: #{critic_forward.1} parent=0 // pred_check
    _
  $region23: #{critic_forward.1} parent=0 // pred_check_branch
    %24 = sbr.rel (0) target = $region25
  $region24: #{critic_forward.1} parent=0 // pred_region
    _
  $region25: #{critic_forward.1} parent=0 // pred_fallthru
    _
  // Predicated region
  $region26: #{critic_forward.1} parent=0 // pred_check
    _
  $region27: #{critic_forward.1} parent=0 // pred_check_branch
    %26 = sbr.rel (0) target = $region29
  $region28: #{critic_forward.1} parent=0 // pred_region
    _
  $region29: #{critic_forward.1} parent=0 // pred_fallthru
    _
  %v28 = vld [vmem:[%s0] sm:$0xf]
  %v29 = vld [vmem:[%s0 + $0x4] sm:$0xf]
  %v30 = vld [vmem:[%s1] sm:$0xff]
  %v31 = vld [vmem:[%s1 + $0x8] sm:$0xff]
  %v32 = vld [vmem:[%s1 + $0x10] sm:$0xff]
  %v33 = vld [vmem:[%s1 + $0x18] sm:$0xff]
  %v34 = vld [vmem:[%s1 + $0x20] sm:$0xff]
  %v35 = vld [vmem:[%s1 + $0x28] sm:$0xff]
  %v36 = vld [vmem:[%s1 + $0x30] sm:$0xff]
  %v37 = vld [vmem:[%s1 + $0x38] sm:$0xff]
  %v38 = vld [vmem:[%s1 + $0x40] sm:$0xff]
  %v39 = vld [vmem:[%s1 + $0x48] sm:$0xff]
  %v40 = vld [vmem:[%s1 + $0x50] sm:$0xff]
  %v41 = vld [vmem:[%s1 + $0x58] sm:$0xff]
  %v42 = vld [vmem:[%s1 + $0x60] sm:$0xff]
  %v43 = vld [vmem:[%s1 + $0x68] sm:$0xff]
  %v44 = vld [vmem:[%s1 + $0x70] sm:$0xff]
  %v45 = vld [vmem:[%s1 + $0x78] sm:$0xff]
  %v46 = vld [vmem:[%s1 + $0x80] sm:$0xff]
  %v47 = vld [vmem:[%s1 + $0x88] sm:$0xff]
  %v48 = vld [vmem:[%s1 + $0x90] sm:$0xff]
  %v49 = vld [vmem:[%s1 + $0x98] sm:$0xff]
  %v50 = vld [vmem:[%s1 + $0xa0] sm:$0xff]
  %v51 = vld [vmem:[%s1 + $0xa8] sm:$0xff]
  %v52 = vld [vmem:[%s1 + $0xb0] sm:$0xff]
  %v53 = vld [vmem:[%s1 + $0xb8] sm:$0xff]
  %v54 = vld [vmem:[%s1 + $0xc0] sm:$0xff]
  %v55 = vld [vmem:[%s1 + $0xc8] sm:$0xff]
  %v56 = vld [vmem:[%s1 + $0xd0] sm:$0xff]
  %v57 = vld [vmem:[%s1 + $0xd8] sm:$0xff]
  %v58 = vld [vmem:[%s1 + $0xe0] sm:$0xff]
  %v59 = vld [vmem:[%s1 + $0xe8] sm:$0xff]
  %v60 = vld [vmem:[%s1 + $0xf0] sm:$0xff]
  %v61 = vld [vmem:[%s1 + $0xf8] sm:$0xff]
  %v62 = vld [vmem:[%s1 + $0x100] sm:$0xff]
  %v63 = vld [vmem:[%s1 + $0x108] sm:$0xff]
  %v64 = vld [vmem:[%s1 + $0x110] sm:$0xff]
  %v65 = vld [vmem:[%s1 + $0x118] sm:$0xff]
  %v66 = vld [vmem:[%s1 + $0x120] sm:$0xff]
  %v67 = vld [vmem:[%s1 + $0x128] sm:$0xff]
  %v68 = vld [vmem:[%s1 + $0x130] sm:$0xff]
  %v69 = vld [vmem:[%s1 + $0x138] sm:$0xff]
  %v70 = vld [vmem:[%s1 + $0x140] sm:$0xff]
  %v71 = vld [vmem:[%s1 + $0x148] sm:$0xff]
  %v72 = vld [vmem:[%s1 + $0x150] sm:$0xff]
  %v73 = vld [vmem:[%s1 + $0x158] sm:$0xff]
  %v74 = vld [vmem:[%s1 + $0x160] sm:$0xff]
  %v75 = vld [vmem:[%s1 + $0x168] sm:$0xff]
  %v76 = vld [vmem:[%s1 + $0x170] sm:$0xff]
  %v77 = vld [vmem:[%s1 + $0x178] sm:$0xff]
  %v78 = vld [vmem:[%s1 + $0x180] sm:$0xff]
  %v79 = vld [vmem:[%s1 + $0x188] sm:$0xff]
  %v80 = vld [vmem:[%s1 + $0x190] sm:$0xff]
  %v81 = vld [vmem:[%s1 + $0x198] sm:$0xff]
  %v82 = vld [vmem:[%s1 + $0x1a0] sm:$0xff]
  %v83 = vld [vmem:[%s1 + $0x1a8] sm:$0xff]
  %v84 = vld [vmem:[%s1 + $0x1b0] sm:$0xff]
  %v85 = vld [vmem:[%s1 + $0x1b8] sm:$0xff]
  %v86 = vld [vmem:[%s1 + $0x1c0] sm:$0xff]
  %v87 = vld [vmem:[%s1 + $0x1c8] sm:$0xff]
  %v88 = vld [vmem:[%s1 + $0x1d0] sm:$0xff]
  %v89 = vld [vmem:[%s1 + $0x1d8] sm:$0xff]
  %v90 = vld [vmem:[%s1 + $0x1e0] sm:$0xff]
  %v91 = vld [vmem:[%s1 + $0x1e8] sm:$0xff]
  %v92 = vld [vmem:[%s1 + $0x1f0] sm:$0xff]
  %v93 = vld [vmem:[%s1 + $0x1f8] sm:$0xff]
  %v94 = vld [vmem:[%s2] sm:$0xff]
  %v96 = vlaneseq
  %v97 = vshrl.u32 %v96, 7
  %v98 = vsub.s32 0, %v97
  %v99 = vrot.slane %v94, %v98
  %v100 = vlaneseq
  %v101 = vshrl.u32 %v100, 7
  %v102 = vsub.s32 1, %v101
  %v103 = vrot.slane %v94, %v102
  %v104 = vlaneseq
  %v105 = vshrl.u32 %v104, 7
  %v106 = vsub.s32 2, %v105
  %v107 = vrot.slane %v94, %v106
  %v108 = vlaneseq
  %v109 = vshrl.u32 %v108, 7
  %v110 = vsub.s32 3, %v109
  %v111 = vrot.slane %v94, %v110
  %v112 = vlaneseq
  %v113 = vshrl.u32 %v112, 7
  %v114 = vsub.s32 4, %v113
  %v115 = vrot.slane %v94, %v114
  %v116 = vlaneseq
  %v117 = vshrl.u32 %v116, 7
  %v118 = vsub.s32 5, %v117
  %v119 = vrot.slane %v94, %v118
  %v120 = vlaneseq
  %v121 = vshrl.u32 %v120, 7
  %v122 = vsub.s32 6, %v121
  %v123 = vrot.slane %v94, %v122
  %v124 = vlaneseq
  %v125 = vshrl.u32 %v124, 7
  %v126 = vsub.s32 7, %v125
  %v127 = vrot.slane %v94, %v126
  %v138 = vunpack.c.l.b16 %v28
  %v139 = vunpack.c.l.b16 %v29
  %v140 = vpack.c.b16 %v139, %v138
  %v206 = vunpack.c.l.b16 %v30
  %v207 = vunpack.c.h.b16 %v30
  %v208 = vunpack.c.l.b16 %v31
  %v209 = vunpack.c.h.b16 %v31
  %v210 = vunpack.c.l.b16 %v32
  %v211 = vunpack.c.h.b16 %v32
  %v212 = vunpack.c.l.b16 %v33
  %v213 = vunpack.c.h.b16 %v33
  %v214 = vunpack.c.l.b16 %v34
  %v215 = vunpack.c.h.b16 %v34
  %v216 = vunpack.c.l.b16 %v35
  %v217 = vunpack.c.h.b16 %v35
  %v218 = vunpack.c.l.b16 %v36
  %v219 = vunpack.c.h.b16 %v36
  %v220 = vunpack.c.l.b16 %v37
  %v221 = vunpack.c.h.b16 %v37
  %v222 = vunpack.c.l.b16 %v38
  %v223 = vunpack.c.h.b16 %v38
  %v224 = vunpack.c.l.b16 %v39
  %v225 = vunpack.c.h.b16 %v39
  %v226 = vunpack.c.l.b16 %v40
  %v227 = vunpack.c.h.b16 %v40
  %v228 = vunpack.c.l.b16 %v41
  %v229 = vunpack.c.h.b16 %v41
  %v230 = vunpack.c.l.b16 %v42
  %v231 = vunpack.c.h.b16 %v42
  %v232 = vunpack.c.l.b16 %v43
  %v233 = vunpack.c.h.b16 %v43
  %v234 = vunpack.c.l.b16 %v44
  %v235 = vunpack.c.h.b16 %v44
  %v236 = vunpack.c.l.b16 %v45
  %v237 = vunpack.c.h.b16 %v45
  %v238 = vunpack.c.l.b16 %v46
  %v239 = vunpack.c.h.b16 %v46
  %v240 = vunpack.c.l.b16 %v47
  %v241 = vunpack.c.h.b16 %v47
  %v242 = vunpack.c.l.b16 %v48
  %v243 = vunpack.c.h.b16 %v48
  %v244 = vunpack.c.l.b16 %v49
  %v245 = vunpack.c.h.b16 %v49
  %v246 = vunpack.c.l.b16 %v50
  %v247 = vunpack.c.h.b16 %v50
  %v248 = vunpack.c.l.b16 %v51
  %v249 = vunpack.c.h.b16 %v51
  %v250 = vunpack.c.l.b16 %v52
  %v251 = vunpack.c.h.b16 %v52
  %v252 = vunpack.c.l.b16 %v53
  %v253 = vunpack.c.h.b16 %v53
  %v254 = vunpack.c.l.b16 %v54
  %v255 = vunpack.c.h.b16 %v54
  %v256 = vunpack.c.l.b16 %v55
  %v257 = vunpack.c.h.b16 %v55
  %v258 = vunpack.c.l.b16 %v56
  %v259 = vunpack.c.h.b16 %v56
  %v260 = vunpack.c.l.b16 %v57
  %v261 = vunpack.c.h.b16 %v57
  %v262 = vunpack.c.l.b16 %v58
  %v263 = vunpack.c.h.b16 %v58
  %v264 = vunpack.c.l.b16 %v59
  %v265 = vunpack.c.h.b16 %v59
  %v266 = vunpack.c.l.b16 %v60
  %v267 = vunpack.c.h.b16 %v60
  %v268 = vunpack.c.l.b16 %v61
  %v269 = vunpack.c.h.b16 %v61
  %v270 = vunpack.c.l.b16 %v62
  %v271 = vunpack.c.h.b16 %v62
  %v272 = vunpack.c.l.b16 %v63
  %v273 = vunpack.c.h.b16 %v63
  %v274 = vunpack.c.l.b16 %v64
  %v275 = vunpack.c.h.b16 %v64
  %v276 = vunpack.c.l.b16 %v65
  %v277 = vunpack.c.h.b16 %v65
  %v278 = vunpack.c.l.b16 %v66
  %v279 = vunpack.c.h.b16 %v66
  %v280 = vunpack.c.l.b16 %v67
  %v281 = vunpack.c.h.b16 %v67
  %v282 = vunpack.c.l.b16 %v68
  %v283 = vunpack.c.h.b16 %v68
  %v284 = vunpack.c.l.b16 %v69
  %v285 = vunpack.c.h.b16 %v69
  %v286 = vunpack.c.l.b16 %v70
  %v287 = vunpack.c.h.b16 %v70
  %v288 = vunpack.c.l.b16 %v71
  %v289 = vunpack.c.h.b16 %v71
  %v290 = vunpack.c.l.b16 %v72
  %v291 = vunpack.c.h.b16 %v72
  %v292 = vunpack.c.l.b16 %v73
  %v293 = vunpack.c.h.b16 %v73
  %v294 = vunpack.c.l.b16 %v74
  %v295 = vunpack.c.h.b16 %v74
  %v296 = vunpack.c.l.b16 %v75
  %v297 = vunpack.c.h.b16 %v75
  %v298 = vunpack.c.l.b16 %v76
  %v299 = vunpack.c.h.b16 %v76
  %v300 = vunpack.c.l.b16 %v77
  %v301 = vunpack.c.h.b16 %v77
  %v302 = vunpack.c.l.b16 %v78
  %v303 = vunpack.c.h.b16 %v78
  %v304 = vunpack.c.l.b16 %v79
  %v305 = vunpack.c.h.b16 %v79
  %v306 = vunpack.c.l.b16 %v80
  %v307 = vunpack.c.h.b16 %v80
  %v308 = vunpack.c.l.b16 %v81
  %v309 = vunpack.c.h.b16 %v81
  %v310 = vunpack.c.l.b16 %v82
  %v311 = vunpack.c.h.b16 %v82
  %v312 = vunpack.c.l.b16 %v83
  %v313 = vunpack.c.h.b16 %v83
  %v314 = vunpack.c.l.b16 %v84
  %v315 = vunpack.c.h.b16 %v84
  %v316 = vunpack.c.l.b16 %v85
  %v317 = vunpack.c.h.b16 %v85
  %v318 = vunpack.c.l.b16 %v86
  %v319 = vunpack.c.h.b16 %v86
  %v320 = vunpack.c.l.b16 %v87
  %v321 = vunpack.c.h.b16 %v87
  %v322 = vunpack.c.l.b16 %v88
  %v323 = vunpack.c.h.b16 %v88
  %v324 = vunpack.c.l.b16 %v89
  %v325 = vunpack.c.h.b16 %v89
  %v326 = vunpack.c.l.b16 %v90
  %v327 = vunpack.c.h.b16 %v90
  %v328 = vunpack.c.l.b16 %v91
  %v329 = vunpack.c.h.b16 %v91
  %v330 = vunpack.c.l.b16 %v92
  %v331 = vunpack.c.h.b16 %v92
  %v332 = vunpack.c.l.b16 %v93
  %v333 = vunpack.c.h.b16 %v93
  %v334 = vpack.c.b16 %v214, %v206
  %v335 = vpack.c.b16 %v215, %v207
  %v336 = vpack.c.b16 %v216, %v208
  %v337 = vpack.c.b16 %v217, %v209
  %v338 = vpack.c.b16 %v218, %v210
  %v339 = vpack.c.b16 %v219, %v211
  %v340 = vpack.c.b16 %v220, %v212
  %v341 = vpack.c.b16 %v221, %v213
  %v342 = vpack.c.b16 %v230, %v222
  %v343 = vpack.c.b16 %v231, %v223
  %v344 = vpack.c.b16 %v232, %v224
  %v345 = vpack.c.b16 %v233, %v225
  %v346 = vpack.c.b16 %v234, %v226
  %v347 = vpack.c.b16 %v235, %v227
  %v348 = vpack.c.b16 %v236, %v228
  %v349 = vpack.c.b16 %v237, %v229
  %v350 = vpack.c.b16 %v246, %v238
  %v351 = vpack.c.b16 %v247, %v239
  %v352 = vpack.c.b16 %v248, %v240
  %v353 = vpack.c.b16 %v249, %v241
  %v354 = vpack.c.b16 %v250, %v242
  %v355 = vpack.c.b16 %v251, %v243
  %v356 = vpack.c.b16 %v252, %v244
  %v357 = vpack.c.b16 %v253, %v245
  %v358 = vpack.c.b16 %v262, %v254
  %v359 = vpack.c.b16 %v263, %v255
  %v360 = vpack.c.b16 %v264, %v256
  %v361 = vpack.c.b16 %v265, %v257
  %v362 = vpack.c.b16 %v266, %v258
  %v363 = vpack.c.b16 %v267, %v259
  %v364 = vpack.c.b16 %v268, %v260
  %v365 = vpack.c.b16 %v269, %v261
  %v366 = vpack.c.b16 %v278, %v270
  %v367 = vpack.c.b16 %v279, %v271
  %v368 = vpack.c.b16 %v280, %v272
  %v369 = vpack.c.b16 %v281, %v273
  %v370 = vpack.c.b16 %v282, %v274
  %v371 = vpack.c.b16 %v283, %v275
  %v372 = vpack.c.b16 %v284, %v276
  %v373 = vpack.c.b16 %v285, %v277
  %v374 = vpack.c.b16 %v294, %v286
  %v375 = vpack.c.b16 %v295, %v287
  %v376 = vpack.c.b16 %v296, %v288
  %v377 = vpack.c.b16 %v297, %v289
  %v378 = vpack.c.b16 %v298, %v290
  %v379 = vpack.c.b16 %v299, %v291
  %v380 = vpack.c.b16 %v300, %v292
  %v381 = vpack.c.b16 %v301, %v293
  %v382 = vpack.c.b16 %v310, %v302
  %v383 = vpack.c.b16 %v311, %v303
  %v384 = vpack.c.b16 %v312, %v304
  %v385 = vpack.c.b16 %v313, %v305
  %v386 = vpack.c.b16 %v314, %v306
  %v387 = vpack.c.b16 %v315, %v307
  %v388 = vpack.c.b16 %v316, %v308
  %v389 = vpack.c.b16 %v317, %v309
  %v390 = vpack.c.b16 %v326, %v318
  %v391 = vpack.c.b16 %v327, %v319
  %v392 = vpack.c.b16 %v328, %v320
  %v393 = vpack.c.b16 %v329, %v321
  %v394 = vpack.c.b16 %v330, %v322
  %v395 = vpack.c.b16 %v331, %v323
  %v396 = vpack.c.b16 %v332, %v324
  %v397 = vpack.c.b16 %v333, %v325
  %462 = vmatprep.subr.bf16.mxu0 %v391
  %463 = vmatpush1.bf16.msra.mxu0 %v390
  %464 = vmatprep.subr.bf16.mxu0 %v383
  %465 = vmatpush1.bf16.msra.mxu0 %v382
  %466 = vmatprep.subr.bf16.mxu0 %v375
  %467 = vmatpush1.bf16.msra.mxu0 %v374
  %468 = vmatprep.subr.bf16.mxu0 %v367
  %469 = vmatpush1.bf16.msra.mxu0 %v366
  %470 = vmatprep.subr.bf16.mxu0 %v359
  %471 = vmatpush1.bf16.msra.mxu0 %v358
  %472 = vmatprep.subr.bf16.mxu0 %v351
  %473 = vmatpush1.bf16.msra.mxu0 %v350
  %474 = vmatprep.subr.bf16.mxu0 %v343
  %475 = vmatpush1.bf16.msra.mxu0 %v342
  %476 = vmatprep.subr.bf16.mxu0 %v335
  %477 = vmatpush1.bf16.msra.mxu0 %v334
  %478 = vmatprep.subr.bf16.mxu0 0
  %479 = vmatpush2.bf16.msra.mxu0 0
  %480 = vmatprep.subr.bf16.mxu0 0
  %481 = vmatpush2.bf16.msra.mxu0 0
  %482 = vmatprep.subr.bf16.mxu0 0
  %483 = vmatpush2.bf16.msra.mxu0 0
  %484 = vmatprep.subr.bf16.mxu0 0
  %485 = vmatpush2.bf16.msra.mxu0 0
  %486 = vmatprep.subr.bf16.mxu0 0
  %487 = vmatpush2.bf16.msra.mxu0 0
  %488 = vmatprep.subr.bf16.mxu0 0
  %489 = vmatpush2.bf16.msra.mxu0 0
  %490 = vmatprep.subr.bf16.mxu0 0
  %491 = vmatpush2.bf16.msra.mxu0 0
  %492 = vmatprep.subr.bf16.mxu0 0
  %493 = vmatpush2.bf16.msra.mxu0 0
  %494 = vmatprep.mubr.bf16.mxu0 0
  %495 = vmatmul.mubr.bf16.gmra.mxu0 %v140
  %v496 = vpop.f32.mrf.mxu0
  %v497 = vadd.f32 %v99, %v496
  %v498 = vpop.f32.mrf.mxu0
  %v499 = vadd.f32 %v103, %v498
  %v500 = vpop.f32.mrf.mxu0
  %v501 = vadd.f32 %v99, %v500
  %v502 = vpop.f32.mrf.mxu0
  %v503 = vadd.f32 %v103, %v502
  %504 = vdwg.mxu0
  %505 = vmatprep.subr.bf16.mxu0 %v393
  %506 = vmatpush1.bf16.msra.mxu0 %v392
  %507 = vmatprep.subr.bf16.mxu0 %v385
  %508 = vmatpush1.bf16.msra.mxu0 %v384
  %509 = vmatprep.subr.bf16.mxu0 %v377
  %510 = vmatpush1.bf16.msra.mxu0 %v376
  %511 = vmatprep.subr.bf16.mxu0 %v369
  %512 = vmatpush1.bf16.msra.mxu0 %v368
  %513 = vmatprep.subr.bf16.mxu0 %v361
  %514 = vmatpush1.bf16.msra.mxu0 %v360
  %515 = vmatprep.subr.bf16.mxu0 %v353
  %516 = vmatpush1.bf16.msra.mxu0 %v352
  %517 = vmatprep.subr.bf16.mxu0 %v345
  %518 = vmatpush1.bf16.msra.mxu0 %v344
  %519 = vmatprep.subr.bf16.mxu0 %v337
  %520 = vmatpush1.bf16.msra.mxu0 %v336
  %521 = vmatprep.subr.bf16.mxu0 0
  %522 = vmatpush2.bf16.msra.mxu0 0
  %523 = vmatprep.subr.bf16.mxu0 0
  %524 = vmatpush2.bf16.msra.mxu0 0
  %525 = vmatprep.subr.bf16.mxu0 0
  %526 = vmatpush2.bf16.msra.mxu0 0
  %527 = vmatprep.subr.bf16.mxu0 0
  %528 = vmatpush2.bf16.msra.mxu0 0
  %529 = vmatprep.subr.bf16.mxu0 0
  %530 = vmatpush2.bf16.msra.mxu0 0
  %531 = vmatprep.subr.bf16.mxu0 0
  %532 = vmatpush2.bf16.msra.mxu0 0
  %533 = vmatprep.subr.bf16.mxu0 0
  %534 = vmatpush2.bf16.msra.mxu0 0
  %535 = vmatprep.subr.bf16.mxu0 0
  %536 = vmatpush2.bf16.msra.mxu0 0
  %537 = vmatprep.mubr.bf16.mxu0 0
  %538 = vmatmul.mubr.bf16.gmra.mxu0 %v140
  %v539 = vpop.f32.mrf.mxu0
  %v540 = vadd.f32 %v107, %v539
  %v541 = vpop.f32.mrf.mxu0
  %v542 = vadd.f32 %v111, %v541
  %v543 = vpop.f32.mrf.mxu0
  %v544 = vadd.f32 %v107, %v543
  %v545 = vpop.f32.mrf.mxu0
  %v546 = vadd.f32 %v111, %v545
  %547 = vdwg.mxu0
  %548 = vmatprep.subr.bf16.mxu0 %v395
  %549 = vmatpush1.bf16.msra.mxu0 %v394
  %550 = vmatprep.subr.bf16.mxu0 %v387
  %551 = vmatpush1.bf16.msra.mxu0 %v386
  %552 = vmatprep.subr.bf16.mxu0 %v379
  %553 = vmatpush1.bf16.msra.mxu0 %v378
  %554 = vmatprep.subr.bf16.mxu0 %v371
  %555 = vmatpush1.bf16.msra.mxu0 %v370
  %556 = vmatprep.subr.bf16.mxu0 %v363
  %557 = vmatpush1.bf16.msra.mxu0 %v362
  %558 = vmatprep.subr.bf16.mxu0 %v355
  %559 = vmatpush1.bf16.msra.mxu0 %v354
  %560 = vmatprep.subr.bf16.mxu0 %v347
  %561 = vmatpush1.bf16.msra.mxu0 %v346
  %562 = vmatprep.subr.bf16.mxu0 %v339
  %563 = vmatpush1.bf16.msra.mxu0 %v338
  %564 = vmatprep.subr.bf16.mxu0 0
  %565 = vmatpush2.bf16.msra.mxu0 0
  %566 = vmatprep.subr.bf16.mxu0 0
  %567 = vmatpush2.bf16.msra.mxu0 0
  %568 = vmatprep.subr.bf16.mxu0 0
  %569 = vmatpush2.bf16.msra.mxu0 0
  %570 = vmatprep.subr.bf16.mxu0 0
  %571 = vmatpush2.bf16.msra.mxu0 0
  %572 = vmatprep.subr.bf16.mxu0 0
  %573 = vmatpush2.bf16.msra.mxu0 0
  %574 = vmatprep.subr.bf16.mxu0 0
  %575 = vmatpush2.bf16.msra.mxu0 0
  %576 = vmatprep.subr.bf16.mxu0 0
  %577 = vmatpush2.bf16.msra.mxu0 0
  %578 = vmatprep.subr.bf16.mxu0 0
  %579 = vmatpush2.bf16.msra.mxu0 0
  %580 = vmatprep.mubr.bf16.mxu0 0
  %581 = vmatmul.mubr.bf16.gmra.mxu0 %v140
  %v582 = vpop.f32.mrf.mxu0
  %v583 = vadd.f32 %v115, %v582
  %v584 = vpop.f32.mrf.mxu0
  %v585 = vadd.f32 %v119, %v584
  %v586 = vpop.f32.mrf.mxu0
  %v587 = vadd.f32 %v115, %v586
  %v588 = vpop.f32.mrf.mxu0
  %v589 = vadd.f32 %v119, %v588
  %590 = vdwg.mxu0
  %591 = vmatprep.subr.bf16.mxu0 %v397
  %592 = vmatpush1.bf16.msra.mxu0 %v396
  %593 = vmatprep.subr.bf16.mxu0 %v389
  %594 = vmatpush1.bf16.msra.mxu0 %v388
  %595 = vmatprep.subr.bf16.mxu0 %v381
  %596 = vmatpush1.bf16.msra.mxu0 %v380
  %597 = vmatprep.subr.bf16.mxu0 %v373
  %598 = vmatpush1.bf16.msra.mxu0 %v372
  %599 = vmatprep.subr.bf16.mxu0 %v365
  %600 = vmatpush1.bf16.msra.mxu0 %v364
  %601 = vmatprep.subr.bf16.mxu0 %v357
  %602 = vmatpush1.bf16.msra.mxu0 %v356
  %603 = vmatprep.subr.bf16.mxu0 %v349
  %604 = vmatpush1.bf16.msra.mxu0 %v348
  %605 = vmatprep.subr.bf16.mxu0 %v341
  %606 = vmatpush1.bf16.msra.mxu0 %v340
  %607 = vmatprep.subr.bf16.mxu0 0
  %608 = vmatpush2.bf16.msra.mxu0 0
  %609 = vmatprep.subr.bf16.mxu0 0
  %610 = vmatpush2.bf16.msra.mxu0 0
  %611 = vmatprep.subr.bf16.mxu0 0
  %612 = vmatpush2.bf16.msra.mxu0 0
  %613 = vmatprep.subr.bf16.mxu0 0
  %614 = vmatpush2.bf16.msra.mxu0 0
  %615 = vmatprep.subr.bf16.mxu0 0
  %616 = vmatpush2.bf16.msra.mxu0 0
  %617 = vmatprep.subr.bf16.mxu0 0
  %618 = vmatpush2.bf16.msra.mxu0 0
  %619 = vmatprep.subr.bf16.mxu0 0
  %620 = vmatpush2.bf16.msra.mxu0 0
  %621 = vmatprep.subr.bf16.mxu0 0
  %622 = vmatpush2.bf16.msra.mxu0 0
  %623 = vmatprep.mubr.bf16.mxu0 0
  %624 = vmatmul.mubr.bf16.gmra.mxu0 %v140
  %v625 = vpop.f32.mrf.mxu0
  %v626 = vadd.f32 %v123, %v625
  %v627 = vpop.f32.mrf.mxu0
  %v628 = vadd.f32 %v127, %v627
  %v629 = vpop.f32.mrf.mxu0
  %v630 = vadd.f32 %v123, %v629
  %v631 = vpop.f32.mrf.mxu0
  %v632 = vadd.f32 %v127, %v631
  %633 = vdwg.mxu0
  %v634 = vpack.c.bf16 %v501, %v497
  %v635 = vpack.c.bf16 %v503, %v499
  %v636 = vpack.c.bf16 %v544, %v540
  %v637 = vpack.c.bf16 %v546, %v542
  %v638 = vpack.c.bf16 %v587, %v583
  %v639 = vpack.c.bf16 %v589, %v585
  %v640 = vpack.c.bf16 %v630, %v626
  %v641 = vpack.c.bf16 %v632, %v628
  %v642 = vtanh.bf16.pop %v634
  %v643 = vtanh.bf16.pop %v635
  %v644 = vtanh.bf16.pop %v636
  %v645 = vtanh.bf16.pop %v637
  %v646 = vtanh.bf16.pop %v638
  %v647 = vtanh.bf16.pop %v639
  %v648 = vtanh.bf16.pop %v640
  %v649 = vtanh.bf16.pop %v641
  %v650 = vld [vmem:[%s3] sm:$0xff]
  %v651 = vld [vmem:[%s3 + $0x8] sm:$0xff]
  %v652 = vld [vmem:[%s3 + $0x10] sm:$0xff]
  %v653 = vld [vmem:[%s3 + $0x18] sm:$0xff]
  %v654 = vld [vmem:[%s3 + $0x20] sm:$0xff]
  %v655 = vld [vmem:[%s3 + $0x28] sm:$0xff]
  %v656 = vld [vmem:[%s3 + $0x30] sm:$0xff]
  %v657 = vld [vmem:[%s3 + $0x38] sm:$0xff]
  %v658 = vld [vmem:[%s3 + $0x40] sm:$0xff]
  %v659 = vld [vmem:[%s3 + $0x48] sm:$0xff]
  %v660 = vld [vmem:[%s3 + $0x50] sm:$0xff]
  %v661 = vld [vmem:[%s3 + $0x58] sm:$0xff]
  %v662 = vld [vmem:[%s3 + $0x60] sm:$0xff]
  %v663 = vld [vmem:[%s3 + $0x68] sm:$0xff]
  %v664 = vld [vmem:[%s3 + $0x70] sm:$0xff]
  %v665 = vld [vmem:[%s3 + $0x78] sm:$0xff]
  %v666 = vld [vmem:[%s3 + $0x80] sm:$0xff]
  %v667 = vld [vmem:[%s3 + $0x88] sm:$0xff]
  %v668 = vld [vmem:[%s3 + $0x90] sm:$0xff]
  %v669 = vld [vmem:[%s3 + $0x98] sm:$0xff]
  %v670 = vld [vmem:[%s3 + $0xa0] sm:$0xff]
  %v671 = vld [vmem:[%s3 + $0xa8] sm:$0xff]
  %v672 = vld [vmem:[%s3 + $0xb0] sm:$0xff]
  %v673 = vld [vmem:[%s3 + $0xb8] sm:$0xff]
  %v674 = vld [vmem:[%s3 + $0xc0] sm:$0xff]
  %v675 = vld [vmem:[%s3 + $0xc8] sm:$0xff]
  %v676 = vld [vmem:[%s3 + $0xd0] sm:$0xff]
  %v677 = vld [vmem:[%s3 + $0xd8] sm:$0xff]
  %v678 = vld [vmem:[%s3 + $0xe0] sm:$0xff]
  %v679 = vld [vmem:[%s3 + $0xe8] sm:$0xff]
  %v680 = vld [vmem:[%s3 + $0xf0] sm:$0xff]
  %v681 = vld [vmem:[%s3 + $0xf8] sm:$0xff]
  %v682 = vld [vmem:[%s3 + $0x100] sm:$0xff]
  %v683 = vld [vmem:[%s3 + $0x108] sm:$0xff]
  %v684 = vld [vmem:[%s3 + $0x110] sm:$0xff]
  %v685 = vld [vmem:[%s3 + $0x118] sm:$0xff]
  %v686 = vld [vmem:[%s3 + $0x120] sm:$0xff]
  %v687 = vld [vmem:[%s3 + $0x128] sm:$0xff]
  %v688 = vld [vmem:[%s3 + $0x130] sm:$0xff]
  %v689 = vld [vmem:[%s3 + $0x138] sm:$0xff]
  %v690 = vld [vmem:[%s3 + $0x140] sm:$0xff]
  %v691 = vld [vmem:[%s3 + $0x148] sm:$0xff]
  %v692 = vld [vmem:[%s3 + $0x150] sm:$0xff]
  %v693 = vld [vmem:[%s3 + $0x158] sm:$0xff]
  %v694 = vld [vmem:[%s3 + $0x160] sm:$0xff]
  %v695 = vld [vmem:[%s3 + $0x168] sm:$0xff]
  %v696 = vld [vmem:[%s3 + $0x170] sm:$0xff]
  %v697 = vld [vmem:[%s3 + $0x178] sm:$0xff]
  %v698 = vld [vmem:[%s3 + $0x180] sm:$0xff]
  %v699 = vld [vmem:[%s3 + $0x188] sm:$0xff]
  %v700 = vld [vmem:[%s3 + $0x190] sm:$0xff]
  %v701 = vld [vmem:[%s3 + $0x198] sm:$0xff]
  %v702 = vld [vmem:[%s3 + $0x1a0] sm:$0xff]
  %v703 = vld [vmem:[%s3 + $0x1a8] sm:$0xff]
  %v704 = vld [vmem:[%s3 + $0x1b0] sm:$0xff]
  %v705 = vld [vmem:[%s3 + $0x1b8] sm:$0xff]
  %v706 = vld [vmem:[%s3 + $0x1c0] sm:$0xff]
  %v707 = vld [vmem:[%s3 + $0x1c8] sm:$0xff]
  %v708 = vld [vmem:[%s3 + $0x1d0] sm:$0xff]
  %v709 = vld [vmem:[%s3 + $0x1d8] sm:$0xff]
  %v710 = vld [vmem:[%s3 + $0x1e0] sm:$0xff]
  %v711 = vld [vmem:[%s3 + $0x1e8] sm:$0xff]
  %v712 = vld [vmem:[%s3 + $0x1f0] sm:$0xff]
  %v713 = vld [vmem:[%s3 + $0x1f8] sm:$0xff]
  %v714 = vld [vmem:[%s3 + $0x200] sm:$0xff]
  %v715 = vld [vmem:[%s3 + $0x208] sm:$0xff]
  %v716 = vld [vmem:[%s3 + $0x210] sm:$0xff]
  %v717 = vld [vmem:[%s3 + $0x218] sm:$0xff]
  %v718 = vld [vmem:[%s3 + $0x220] sm:$0xff]
  %v719 = vld [vmem:[%s3 + $0x228] sm:$0xff]
  %v720 = vld [vmem:[%s3 + $0x230] sm:$0xff]
  %v721 = vld [vmem:[%s3 + $0x238] sm:$0xff]
  %v722 = vld [vmem:[%s3 + $0x240] sm:$0xff]
  %v723 = vld [vmem:[%s3 + $0x248] sm:$0xff]
  %v724 = vld [vmem:[%s3 + $0x250] sm:$0xff]
  %v725 = vld [vmem:[%s3 + $0x258] sm:$0xff]
  %v726 = vld [vmem:[%s3 + $0x260] sm:$0xff]
  %v727 = vld [vmem:[%s3 + $0x268] sm:$0xff]
  %v728 = vld [vmem:[%s3 + $0x270] sm:$0xff]
  %v729 = vld [vmem:[%s3 + $0x278] sm:$0xff]
  %v730 = vld [vmem:[%s3 + $0x280] sm:$0xff]
  %v731 = vld [vmem:[%s3 + $0x288] sm:$0xff]
  %v732 = vld [vmem:[%s3 + $0x290] sm:$0xff]
  %v733 = vld [vmem:[%s3 + $0x298] sm:$0xff]
  %v734 = vld [vmem:[%s3 + $0x2a0] sm:$0xff]
  %v735 = vld [vmem:[%s3 + $0x2a8] sm:$0xff]
  %v736 = vld [vmem:[%s3 + $0x2b0] sm:$0xff]
  %v737 = vld [vmem:[%s3 + $0x2b8] sm:$0xff]
  %v738 = vld [vmem:[%s3 + $0x2c0] sm:$0xff]
  %v739 = vld [vmem:[%s3 + $0x2c8] sm:$0xff]
  %v740 = vld [vmem:[%s3 + $0x2d0] sm:$0xff]
  %v741 = vld [vmem:[%s3 + $0x2d8] sm:$0xff]
  %v742 = vld [vmem:[%s3 + $0x2e0] sm:$0xff]
  %v743 = vld [vmem:[%s3 + $0x2e8] sm:$0xff]
  %v744 = vld [vmem:[%s3 + $0x2f0] sm:$0xff]
  %v745 = vld [vmem:[%s3 + $0x2f8] sm:$0xff]
  %v746 = vld [vmem:[%s3 + $0x300] sm:$0xff]
  %v747 = vld [vmem:[%s3 + $0x308] sm:$0xff]
  %v748 = vld [vmem:[%s3 + $0x310] sm:$0xff]
  %v749 = vld [vmem:[%s3 + $0x318] sm:$0xff]
  %v750 = vld [vmem:[%s3 + $0x320] sm:$0xff]
  %v751 = vld [vmem:[%s3 + $0x328] sm:$0xff]
  %v752 = vld [vmem:[%s3 + $0x330] sm:$0xff]
  %v753 = vld [vmem:[%s3 + $0x338] sm:$0xff]
  %v754 = vld [vmem:[%s3 + $0x340] sm:$0xff]
  %v755 = vld [vmem:[%s3 + $0x348] sm:$0xff]
  %v756 = vld [vmem:[%s3 + $0x350] sm:$0xff]
  %v757 = vld [vmem:[%s3 + $0x358] sm:$0xff]
  %v758 = vld [vmem:[%s3 + $0x360] sm:$0xff]
  %v759 = vld [vmem:[%s3 + $0x368] sm:$0xff]
  %v760 = vld [vmem:[%s3 + $0x370] sm:$0xff]
  %v761 = vld [vmem:[%s3 + $0x378] sm:$0xff]
  %v762 = vld [vmem:[%s3 + $0x380] sm:$0xff]
  %v763 = vld [vmem:[%s3 + $0x388] sm:$0xff]
  %v764 = vld [vmem:[%s3 + $0x390] sm:$0xff]
  %v765 = vld [vmem:[%s3 + $0x398] sm:$0xff]
  %v766 = vld [vmem:[%s3 + $0x3a0] sm:$0xff]
  %v767 = vld [vmem:[%s3 + $0x3a8] sm:$0xff]
  %v768 = vld [vmem:[%s3 + $0x3b0] sm:$0xff]
  %v769 = vld [vmem:[%s3 + $0x3b8] sm:$0xff]
  %v770 = vld [vmem:[%s3 + $0x3c0] sm:$0xff]
  %v771 = vld [vmem:[%s3 + $0x3c8] sm:$0xff]
  %v772 = vld [vmem:[%s3 + $0x3d0] sm:$0xff]
  %v773 = vld [vmem:[%s3 + $0x3d8] sm:$0xff]
  %v774 = vld [vmem:[%s3 + $0x3e0] sm:$0xff]
  %v775 = vld [vmem:[%s3 + $0x3e8] sm:$0xff]
  %v776 = vld [vmem:[%s3 + $0x3f0] sm:$0xff]
  %v777 = vld [vmem:[%s3 + $0x3f8] sm:$0xff]
  %v778 = vld [vmem:[%s3 + $0x400] sm:$0xff]
  %v779 = vld [vmem:[%s3 + $0x408] sm:$0xff]
  %v780 = vld [vmem:[%s3 + $0x410] sm:$0xff]
  %v781 = vld [vmem:[%s3 + $0x418] sm:$0xff]
  %v782 = vld [vmem:[%s3 + $0x420] sm:$0xff]
  %v783 = vld [vmem:[%s3 + $0x428] sm:$0xff]
  %v784 = vld [vmem:[%s3 + $0x430] sm:$0xff]
  %v785 = vld [vmem:[%s3 + $0x438] sm:$0xff]
  %v786 = vld [vmem:[%s3 + $0x440] sm:$0xff]
  %v787 = vld [vmem:[%s3 + $0x448] sm:$0xff]
  %v788 = vld [vmem:[%s3 + $0x450] sm:$0xff]
  %v789 = vld [vmem:[%s3 + $0x458] sm:$0xff]
  %v790 = vld [vmem:[%s3 + $0x460] sm:$0xff]
  %v791 = vld [vmem:[%s3 + $0x468] sm:$0xff]
  %v792 = vld [vmem:[%s3 + $0x470] sm:$0xff]
  %v793 = vld [vmem:[%s3 + $0x478] sm:$0xff]
  %v794 = vld [vmem:[%s3 + $0x480] sm:$0xff]
  %v795 = vld [vmem:[%s3 + $0x488] sm:$0xff]
  %v796 = vld [vmem:[%s3 + $0x490] sm:$0xff]
  %v797 = vld [vmem:[%s3 + $0x498] sm:$0xff]
  %v798 = vld [vmem:[%s3 + $0x4a0] sm:$0xff]
  %v799 = vld [vmem:[%s3 + $0x4a8] sm:$0xff]
  %v800 = vld [vmem:[%s3 + $0x4b0] sm:$0xff]
  %v801 = vld [vmem:[%s3 + $0x4b8] sm:$0xff]
  %v802 = vld [vmem:[%s3 + $0x4c0] sm:$0xff]
  %v803 = vld [vmem:[%s3 + $0x4c8] sm:$0xff]
  %v804 = vld [vmem:[%s3 + $0x4d0] sm:$0xff]
  %v805 = vld [vmem:[%s3 + $0x4d8] sm:$0xff]
  %v806 = vld [vmem:[%s3 + $0x4e0] sm:$0xff]
  %v807 = vld [vmem:[%s3 + $0x4e8] sm:$0xff]
  %v808 = vld [vmem:[%s3 + $0x4f0] sm:$0xff]
  %v809 = vld [vmem:[%s3 + $0x4f8] sm:$0xff]
  %v810 = vld [vmem:[%s3 + $0x500] sm:$0xff]
  %v811 = vld [vmem:[%s3 + $0x508] sm:$0xff]
  %v812 = vld [vmem:[%s3 + $0x510] sm:$0xff]
  %v813 = vld [vmem:[%s3 + $0x518] sm:$0xff]
  %v814 = vld [vmem:[%s3 + $0x520] sm:$0xff]
  %v815 = vld [vmem:[%s3 + $0x528] sm:$0xff]
  %v816 = vld [vmem:[%s3 + $0x530] sm:$0xff]
  %v817 = vld [vmem:[%s3 + $0x538] sm:$0xff]
  %v818 = vld [vmem:[%s3 + $0x540] sm:$0xff]
  %v819 = vld [vmem:[%s3 + $0x548] sm:$0xff]
  %v820 = vld [vmem:[%s3 + $0x550] sm:$0xff]
  %v821 = vld [vmem:[%s3 + $0x558] sm:$0xff]
  %v822 = vld [vmem:[%s3 + $0x560] sm:$0xff]
  %v823 = vld [vmem:[%s3 + $0x568] sm:$0xff]
  %v824 = vld [vmem:[%s3 + $0x570] sm:$0xff]
  %v825 = vld [vmem:[%s3 + $0x578] sm:$0xff]
  %v826 = vld [vmem:[%s3 + $0x580] sm:$0xff]
  %v827 = vld [vmem:[%s3 + $0x588] sm:$0xff]
  %v828 = vld [vmem:[%s3 + $0x590] sm:$0xff]
  %v829 = vld [vmem:[%s3 + $0x598] sm:$0xff]
  %v830 = vld [vmem:[%s3 + $0x5a0] sm:$0xff]
  %v831 = vld [vmem:[%s3 + $0x5a8] sm:$0xff]
  %v832 = vld [vmem:[%s3 + $0x5b0] sm:$0xff]
  %v833 = vld [vmem:[%s3 + $0x5b8] sm:$0xff]
  %v834 = vld [vmem:[%s3 + $0x5c0] sm:$0xff]
  %v835 = vld [vmem:[%s3 + $0x5c8] sm:$0xff]
  %v836 = vld [vmem:[%s3 + $0x5d0] sm:$0xff]
  %v837 = vld [vmem:[%s3 + $0x5d8] sm:$0xff]
  %v838 = vld [vmem:[%s3 + $0x5e0] sm:$0xff]
  %v839 = vld [vmem:[%s3 + $0x5e8] sm:$0xff]
  %v840 = vld [vmem:[%s3 + $0x5f0] sm:$0xff]
  %v841 = vld [vmem:[%s3 + $0x5f8] sm:$0xff]
  %v842 = vld [vmem:[%s3 + $0x600] sm:$0xff]
  %v843 = vld [vmem:[%s3 + $0x608] sm:$0xff]
  %v844 = vld [vmem:[%s3 + $0x610] sm:$0xff]
  %v845 = vld [vmem:[%s3 + $0x618] sm:$0xff]
  %v846 = vld [vmem:[%s3 + $0x620] sm:$0xff]
  %v847 = vld [vmem:[%s3 + $0x628] sm:$0xff]
  %v848 = vld [vmem:[%s3 + $0x630] sm:$0xff]
  %v849 = vld [vmem:[%s3 + $0x638] sm:$0xff]
  %v850 = vld [vmem:[%s3 + $0x640] sm:$0xff]
  %v851 = vld [vmem:[%s3 + $0x648] sm:$0xff]
  %v852 = vld [vmem:[%s3 + $0x650] sm:$0xff]
  %v853 = vld [vmem:[%s3 + $0x658] sm:$0xff]
  %v854 = vld [vmem:[%s3 + $0x660] sm:$0xff]
  %v855 = vld [vmem:[%s3 + $0x668] sm:$0xff]
  %v856 = vld [vmem:[%s3 + $0x670] sm:$0xff]
  %v857 = vld [vmem:[%s3 + $0x678] sm:$0xff]
  %v858 = vld [vmem:[%s3 + $0x680] sm:$0xff]
  %v859 = vld [vmem:[%s3 + $0x688] sm:$0xff]
  %v860 = vld [vmem:[%s3 + $0x690] sm:$0xff]
  %v861 = vld [vmem:[%s3 + $0x698] sm:$0xff]
  %v862 = vld [vmem:[%s3 + $0x6a0] sm:$0xff]
  %v863 = vld [vmem:[%s3 + $0x6a8] sm:$0xff]
  %v864 = vld [vmem:[%s3 + $0x6b0] sm:$0xff]
  %v865 = vld [vmem:[%s3 + $0x6b8] sm:$0xff]
  %v866 = vld [vmem:[%s3 + $0x6c0] sm:$0xff]
  %v867 = vld [vmem:[%s3 + $0x6c8] sm:$0xff]
  %v868 = vld [vmem:[%s3 + $0x6d0] sm:$0xff]
  %v869 = vld [vmem:[%s3 + $0x6d8] sm:$0xff]
  %v870 = vld [vmem:[%s3 + $0x6e0] sm:$0xff]
  %v871 = vld [vmem:[%s3 + $0x6e8] sm:$0xff]
  %v872 = vld [vmem:[%s3 + $0x6f0] sm:$0xff]
  %v873 = vld [vmem:[%s3 + $0x6f8] sm:$0xff]
  %v874 = vld [vmem:[%s3 + $0x700] sm:$0xff]
  %v875 = vld [vmem:[%s3 + $0x708] sm:$0xff]
  %v876 = vld [vmem:[%s3 + $0x710] sm:$0xff]
  %v877 = vld [vmem:[%s3 + $0x718] sm:$0xff]
  %v878 = vld [vmem:[%s3 + $0x720] sm:$0xff]
  %v879 = vld [vmem:[%s3 + $0x728] sm:$0xff]
  %v880 = vld [vmem:[%s3 + $0x730] sm:$0xff]
  %v881 = vld [vmem:[%s3 + $0x738] sm:$0xff]
  %v882 = vld [vmem:[%s3 + $0x740] sm:$0xff]
  %v883 = vld [vmem:[%s3 + $0x748] sm:$0xff]
  %v884 = vld [vmem:[%s3 + $0x750] sm:$0xff]
  %v885 = vld [vmem:[%s3 + $0x758] sm:$0xff]
  %v886 = vld [vmem:[%s3 + $0x760] sm:$0xff]
  %v887 = vld [vmem:[%s3 + $0x768] sm:$0xff]
  %v888 = vld [vmem:[%s3 + $0x770] sm:$0xff]
  %v889 = vld [vmem:[%s3 + $0x778] sm:$0xff]
  %v890 = vld [vmem:[%s3 + $0x780] sm:$0xff]
  %v891 = vld [vmem:[%s3 + $0x788] sm:$0xff]
  %v892 = vld [vmem:[%s3 + $0x790] sm:$0xff]
  %v893 = vld [vmem:[%s3 + $0x798] sm:$0xff]
  %v894 = vld [vmem:[%s3 + $0x7a0] sm:$0xff]
  %v895 = vld [vmem:[%s3 + $0x7a8] sm:$0xff]
  %v896 = vld [vmem:[%s3 + $0x7b0] sm:$0xff]
  %v897 = vld [vmem:[%s3 + $0x7b8] sm:$0xff]
  %v898 = vld [vmem:[%s3 + $0x7c0] sm:$0xff]
  %v899 = vld [vmem:[%s3 + $0x7c8] sm:$0xff]
  %v900 = vld [vmem:[%s3 + $0x7d0] sm:$0xff]
  %v901 = vld [vmem:[%s3 + $0x7d8] sm:$0xff]
  %v902 = vld [vmem:[%s3 + $0x7e0] sm:$0xff]
  %v903 = vld [vmem:[%s3 + $0x7e8] sm:$0xff]
  %v904 = vld [vmem:[%s3 + $0x7f0] sm:$0xff]
  %v905 = vld [vmem:[%s3 + $0x7f8] sm:$0xff]
  %v906 = vld [vmem:[%s4] sm:$0xf]
  %v908 = vlaneseq
  %v909 = vshrl.u32 %v908, 7
  %v910 = vsub.s32 0, %v909
  %v911 = vrot.slane %v906, %v910
  %v912 = vlaneseq
  %v913 = vshrl.u32 %v912, 7
  %v914 = vsub.s32 1, %v913
  %v915 = vrot.slane %v906, %v914
  %v916 = vlaneseq
  %v917 = vshrl.u32 %v916, 7
  %v918 = vsub.s32 2, %v917
  %v919 = vrot.slane %v906, %v918
  %v920 = vlaneseq
  %v921 = vshrl.u32 %v920, 7
  %v922 = vsub.s32 3, %v921
  %v923 = vrot.slane %v906, %v922
  %v1184 = vunpack.c.l.b16 %v650
  %v1185 = vunpack.c.h.b16 %v650
  %v1186 = vunpack.c.l.b16 %v651
  %v1187 = vunpack.c.h.b16 %v651
  %v1188 = vunpack.c.l.b16 %v652
  %v1189 = vunpack.c.h.b16 %v652
  %v1190 = vunpack.c.l.b16 %v653
  %v1191 = vunpack.c.h.b16 %v653
  %v1192 = vunpack.c.l.b16 %v654
  %v1193 = vunpack.c.h.b16 %v654
  %v1194 = vunpack.c.l.b16 %v655
  %v1195 = vunpack.c.h.b16 %v655
  %v1196 = vunpack.c.l.b16 %v656
  %v1197 = vunpack.c.h.b16 %v656
  %v1198 = vunpack.c.l.b16 %v657
  %v1199 = vunpack.c.h.b16 %v657
  %v1200 = vunpack.c.l.b16 %v658
  %v1201 = vunpack.c.h.b16 %v658
  %v1202 = vunpack.c.l.b16 %v659
  %v1203 = vunpack.c.h.b16 %v659
  %v1204 = vunpack.c.l.b16 %v660
  %v1205 = vunpack.c.h.b16 %v660
  %v1206 = vunpack.c.l.b16 %v661
  %v1207 = vunpack.c.h.b16 %v661
  %v1208 = vunpack.c.l.b16 %v662
  %v1209 = vunpack.c.h.b16 %v662
  %v1210 = vunpack.c.l.b16 %v663
  %v1211 = vunpack.c.h.b16 %v663
  %v1212 = vunpack.c.l.b16 %v664
  %v1213 = vunpack.c.h.b16 %v664
  %v1214 = vunpack.c.l.b16 %v665
  %v1215 = vunpack.c.h.b16 %v665
  %v1216 = vunpack.c.l.b16 %v666
  %v1217 = vunpack.c.h.b16 %v666
  %v1218 = vunpack.c.l.b16 %v667
  %v1219 = vunpack.c.h.b16 %v667
  %v1220 = vunpack.c.l.b16 %v668
  %v1221 = vunpack.c.h.b16 %v668
  %v1222 = vunpack.c.l.b16 %v669
  %v1223 = vunpack.c.h.b16 %v669
  %v1224 = vunpack.c.l.b16 %v670
  %v1225 = vunpack.c.h.b16 %v670
  %v1226 = vunpack.c.l.b16 %v671
  %v1227 = vunpack.c.h.b16 %v671
  %v1228 = vunpack.c.l.b16 %v672
  %v1229 = vunpack.c.h.b16 %v672
  %v1230 = vunpack.c.l.b16 %v673
  %v1231 = vunpack.c.h.b16 %v673
  %v1232 = vunpack.c.l.b16 %v674
  %v1233 = vunpack.c.h.b16 %v674
  %v1234 = vunpack.c.l.b16 %v675
  %v1235 = vunpack.c.h.b16 %v675
  %v1236 = vunpack.c.l.b16 %v676
  %v1237 = vunpack.c.h.b16 %v676
  %v1238 = vunpack.c.l.b16 %v677
  %v1239 = vunpack.c.h.b16 %v677
  %v1240 = vunpack.c.l.b16 %v678
  %v1241 = vunpack.c.h.b16 %v678
  %v1242 = vunpack.c.l.b16 %v679
  %v1243 = vunpack.c.h.b16 %v679
  %v1244 = vunpack.c.l.b16 %v680
  %v1245 = vunpack.c.h.b16 %v680
  %v1246 = vunpack.c.l.b16 %v681
  %v1247 = vunpack.c.h.b16 %v681
  %v1248 = vunpack.c.l.b16 %v682
  %v1249 = vunpack.c.h.b16 %v682
  %v1250 = vunpack.c.l.b16 %v683
  %v1251 = vunpack.c.h.b16 %v683
  %v1252 = vunpack.c.l.b16 %v684
  %v1253 = vunpack.c.h.b16 %v684
  %v1254 = vunpack.c.l.b16 %v685
  %v1255 = vunpack.c.h.b16 %v685
  %v1256 = vunpack.c.l.b16 %v686
  %v1257 = vunpack.c.h.b16 %v686
  %v1258 = vunpack.c.l.b16 %v687
  %v1259 = vunpack.c.h.b16 %v687
  %v1260 = vunpack.c.l.b16 %v688
  %v1261 = vunpack.c.h.b16 %v688
  %v1262 = vunpack.c.l.b16 %v689
  %v1263 = vunpack.c.h.b16 %v689
  %v1264 = vunpack.c.l.b16 %v690
  %v1265 = vunpack.c.h.b16 %v690
  %v1266 = vunpack.c.l.b16 %v691
  %v1267 = vunpack.c.h.b16 %v691
  %v1268 = vunpack.c.l.b16 %v692
  %v1269 = vunpack.c.h.b16 %v692
  %v1270 = vunpack.c.l.b16 %v693
  %v1271 = vunpack.c.h.b16 %v693
  %v1272 = vunpack.c.l.b16 %v694
  %v1273 = vunpack.c.h.b16 %v694
  %v1274 = vunpack.c.l.b16 %v695
  %v1275 = vunpack.c.h.b16 %v695
  %v1276 = vunpack.c.l.b16 %v696
  %v1277 = vunpack.c.h.b16 %v696
  %v1278 = vunpack.c.l.b16 %v697
  %v1279 = vunpack.c.h.b16 %v697
  %v1280 = vunpack.c.l.b16 %v698
  %v1281 = vunpack.c.h.b16 %v698
  %v1282 = vunpack.c.l.b16 %v699
  %v1283 = vunpack.c.h.b16 %v699
  %v1284 = vunpack.c.l.b16 %v700
  %v1285 = vunpack.c.h.b16 %v700
  %v1286 = vunpack.c.l.b16 %v701
  %v1287 = vunpack.c.h.b16 %v701
  %v1288 = vunpack.c.l.b16 %v702
  %v1289 = vunpack.c.h.b16 %v702
  %v1290 = vunpack.c.l.b16 %v703
  %v1291 = vunpack.c.h.b16 %v703
  %v1292 = vunpack.c.l.b16 %v704
  %v1293 = vunpack.c.h.b16 %v704
  %v1294 = vunpack.c.l.b16 %v705
  %v1295 = vunpack.c.h.b16 %v705
  %v1296 = vunpack.c.l.b16 %v706
  %v1297 = vunpack.c.h.b16 %v706
  %v1298 = vunpack.c.l.b16 %v707
  %v1299 = vunpack.c.h.b16 %v707
  %v1300 = vunpack.c.l.b16 %v708
  %v1301 = vunpack.c.h.b16 %v708
  %v1302 = vunpack.c.l.b16 %v709
  %v1303 = vunpack.c.h.b16 %v709
  %v1304 = vunpack.c.l.b16 %v710
  %v1305 = vunpack.c.h.b16 %v710
  %v1306 = vunpack.c.l.b16 %v711
  %v1307 = vunpack.c.h.b16 %v711
  %v1308 = vunpack.c.l.b16 %v712
  %v1309 = vunpack.c.h.b16 %v712
  %v1310 = vunpack.c.l.b16 %v713
  %v1311 = vunpack.c.h.b16 %v713
  %v1312 = vunpack.c.l.b16 %v714
  %v1313 = vunpack.c.h.b16 %v714
  %v1314 = vunpack.c.l.b16 %v715
  %v1315 = vunpack.c.h.b16 %v715
  %v1316 = vunpack.c.l.b16 %v716
  %v1317 = vunpack.c.h.b16 %v716
  %v1318 = vunpack.c.l.b16 %v717
  %v1319 = vunpack.c.h.b16 %v717
  %v1320 = vunpack.c.l.b16 %v718
  %v1321 = vunpack.c.h.b16 %v718
  %v1322 = vunpack.c.l.b16 %v719
  %v1323 = vunpack.c.h.b16 %v719
  %v1324 = vunpack.c.l.b16 %v720
  %v1325 = vunpack.c.h.b16 %v720
  %v1326 = vunpack.c.l.b16 %v721
  %v1327 = vunpack.c.h.b16 %v721
  %v1328 = vunpack.c.l.b16 %v722
  %v1329 = vunpack.c.h.b16 %v722
  %v1330 = vunpack.c.l.b16 %v723
  %v1331 = vunpack.c.h.b16 %v723
  %v1332 = vunpack.c.l.b16 %v724
  %v1333 = vunpack.c.h.b16 %v724
  %v1334 = vunpack.c.l.b16 %v725
  %v1335 = vunpack.c.h.b16 %v725
  %v1336 = vunpack.c.l.b16 %v726
  %v1337 = vunpack.c.h.b16 %v726
  %v1338 = vunpack.c.l.b16 %v727
  %v1339 = vunpack.c.h.b16 %v727
  %v1340 = vunpack.c.l.b16 %v728
  %v1341 = vunpack.c.h.b16 %v728
  %v1342 = vunpack.c.l.b16 %v729
  %v1343 = vunpack.c.h.b16 %v729
  %v1344 = vunpack.c.l.b16 %v730
  %v1345 = vunpack.c.h.b16 %v730
  %v1346 = vunpack.c.l.b16 %v731
  %v1347 = vunpack.c.h.b16 %v731
  %v1348 = vunpack.c.l.b16 %v732
  %v1349 = vunpack.c.h.b16 %v732
  %v1350 = vunpack.c.l.b16 %v733
  %v1351 = vunpack.c.h.b16 %v733
  %v1352 = vunpack.c.l.b16 %v734
  %v1353 = vunpack.c.h.b16 %v734
  %v1354 = vunpack.c.l.b16 %v735
  %v1355 = vunpack.c.h.b16 %v735
  %v1356 = vunpack.c.l.b16 %v736
  %v1357 = vunpack.c.h.b16 %v736
  %v1358 = vunpack.c.l.b16 %v737
  %v1359 = vunpack.c.h.b16 %v737
  %v1360 = vunpack.c.l.b16 %v738
  %v1361 = vunpack.c.h.b16 %v738
  %v1362 = vunpack.c.l.b16 %v739
  %v1363 = vunpack.c.h.b16 %v739
  %v1364 = vunpack.c.l.b16 %v740
  %v1365 = vunpack.c.h.b16 %v740
  %v1366 = vunpack.c.l.b16 %v741
  %v1367 = vunpack.c.h.b16 %v741
  %v1368 = vunpack.c.l.b16 %v742
  %v1369 = vunpack.c.h.b16 %v742
  %v1370 = vunpack.c.l.b16 %v743
  %v1371 = vunpack.c.h.b16 %v743
  %v1372 = vunpack.c.l.b16 %v744
  %v1373 = vunpack.c.h.b16 %v744
  %v1374 = vunpack.c.l.b16 %v745
  %v1375 = vunpack.c.h.b16 %v745
  %v1376 = vunpack.c.l.b16 %v746
  %v1377 = vunpack.c.h.b16 %v746
  %v1378 = vunpack.c.l.b16 %v747
  %v1379 = vunpack.c.h.b16 %v747
  %v1380 = vunpack.c.l.b16 %v748
  %v1381 = vunpack.c.h.b16 %v748
  %v1382 = vunpack.c.l.b16 %v749
  %v1383 = vunpack.c.h.b16 %v749
  %v1384 = vunpack.c.l.b16 %v750
  %v1385 = vunpack.c.h.b16 %v750
  %v1386 = vunpack.c.l.b16 %v751
  %v1387 = vunpack.c.h.b16 %v751
  %v1388 = vunpack.c.l.b16 %v752
  %v1389 = vunpack.c.h.b16 %v752
  %v1390 = vunpack.c.l.b16 %v753
  %v1391 = vunpack.c.h.b16 %v753
  %v1392 = vunpack.c.l.b16 %v754
  %v1393 = vunpack.c.h.b16 %v754
  %v1394 = vunpack.c.l.b16 %v755
  %v1395 = vunpack.c.h.b16 %v755
  %v1396 = vunpack.c.l.b16 %v756
  %v1397 = vunpack.c.h.b16 %v756
  %v1398 = vunpack.c.l.b16 %v757
  %v1399 = vunpack.c.h.b16 %v757
  %v1400 = vunpack.c.l.b16 %v758
  %v1401 = vunpack.c.h.b16 %v758
  %v1402 = vunpack.c.l.b16 %v759
  %v1403 = vunpack.c.h.b16 %v759
  %v1404 = vunpack.c.l.b16 %v760
  %v1405 = vunpack.c.h.b16 %v760
  %v1406 = vunpack.c.l.b16 %v761
  %v1407 = vunpack.c.h.b16 %v761
  %v1408 = vunpack.c.l.b16 %v762
  %v1409 = vunpack.c.h.b16 %v762
  %v1410 = vunpack.c.l.b16 %v763
  %v1411 = vunpack.c.h.b16 %v763
  %v1412 = vunpack.c.l.b16 %v764
  %v1413 = vunpack.c.h.b16 %v764
  %v1414 = vunpack.c.l.b16 %v765
  %v1415 = vunpack.c.h.b16 %v765
  %v1416 = vunpack.c.l.b16 %v766
  %v1417 = vunpack.c.h.b16 %v766
  %v1418 = vunpack.c.l.b16 %v767
  %v1419 = vunpack.c.h.b16 %v767
  %v1420 = vunpack.c.l.b16 %v768
  %v1421 = vunpack.c.h.b16 %v768
  %v1422 = vunpack.c.l.b16 %v769
  %v1423 = vunpack.c.h.b16 %v769
  %v1424 = vunpack.c.l.b16 %v770
  %v1425 = vunpack.c.h.b16 %v770
  %v1426 = vunpack.c.l.b16 %v771
  %v1427 = vunpack.c.h.b16 %v771
  %v1428 = vunpack.c.l.b16 %v772
  %v1429 = vunpack.c.h.b16 %v772
  %v1430 = vunpack.c.l.b16 %v773
  %v1431 = vunpack.c.h.b16 %v773
  %v1432 = vunpack.c.l.b16 %v774
  %v1433 = vunpack.c.h.b16 %v774
  %v1434 = vunpack.c.l.b16 %v775
  %v1435 = vunpack.c.h.b16 %v775
  %v1436 = vunpack.c.l.b16 %v776
  %v1437 = vunpack.c.h.b16 %v776
  %v1438 = vunpack.c.l.b16 %v777
  %v1439 = vunpack.c.h.b16 %v777
  %v1440 = vunpack.c.l.b16 %v778
  %v1441 = vunpack.c.h.b16 %v778
  %v1442 = vunpack.c.l.b16 %v779
  %v1443 = vunpack.c.h.b16 %v779
  %v1444 = vunpack.c.l.b16 %v780
  %v1445 = vunpack.c.h.b16 %v780
  %v1446 = vunpack.c.l.b16 %v781
  %v1447 = vunpack.c.h.b16 %v781
  %v1448 = vunpack.c.l.b16 %v782
  %v1449 = vunpack.c.h.b16 %v782
  %v1450 = vunpack.c.l.b16 %v783
  %v1451 = vunpack.c.h.b16 %v783
  %v1452 = vunpack.c.l.b16 %v784
  %v1453 = vunpack.c.h.b16 %v784
  %v1454 = vunpack.c.l.b16 %v785
  %v1455 = vunpack.c.h.b16 %v785
  %v1456 = vunpack.c.l.b16 %v786
  %v1457 = vunpack.c.h.b16 %v786
  %v1458 = vunpack.c.l.b16 %v787
  %v1459 = vunpack.c.h.b16 %v787
  %v1460 = vunpack.c.l.b16 %v788
  %v1461 = vunpack.c.h.b16 %v788
  %v1462 = vunpack.c.l.b16 %v789
  %v1463 = vunpack.c.h.b16 %v789
  %v1464 = vunpack.c.l.b16 %v790
  %v1465 = vunpack.c.h.b16 %v790
  %v1466 = vunpack.c.l.b16 %v791
  %v1467 = vunpack.c.h.b16 %v791
  %v1468 = vunpack.c.l.b16 %v792
  %v1469 = vunpack.c.h.b16 %v792
  %v1470 = vunpack.c.l.b16 %v793
  %v1471 = vunpack.c.h.b16 %v793
  %v1472 = vunpack.c.l.b16 %v794
  %v1473 = vunpack.c.h.b16 %v794
  %v1474 = vunpack.c.l.b16 %v795
  %v1475 = vunpack.c.h.b16 %v795
  %v1476 = vunpack.c.l.b16 %v796
  %v1477 = vunpack.c.h.b16 %v796
  %v1478 = vunpack.c.l.b16 %v797
  %v1479 = vunpack.c.h.b16 %v797
  %v1480 = vunpack.c.l.b16 %v798
  %v1481 = vunpack.c.h.b16 %v798
  %v1482 = vunpack.c.l.b16 %v799
  %v1483 = vunpack.c.h.b16 %v799
  %v1484 = vunpack.c.l.b16 %v800
  %v1485 = vunpack.c.h.b16 %v800
  %v1486 = vunpack.c.l.b16 %v801
  %v1487 = vunpack.c.h.b16 %v801
  %v1488 = vunpack.c.l.b16 %v802
  %v1489 = vunpack.c.h.b16 %v802
  %v1490 = vunpack.c.l.b16 %v803
  %v1491 = vunpack.c.h.b16 %v803
  %v1492 = vunpack.c.l.b16 %v804
  %v1493 = vunpack.c.h.b16 %v804
  %v1494 = vunpack.c.l.b16 %v805
  %v1495 = vunpack.c.h.b16 %v805
  %v1496 = vunpack.c.l.b16 %v806
  %v1497 = vunpack.c.h.b16 %v806
  %v1498 = vunpack.c.l.b16 %v807
  %v1499 = vunpack.c.h.b16 %v807
  %v1500 = vunpack.c.l.b16 %v808
  %v1501 = vunpack.c.h.b16 %v808
  %v1502 = vunpack.c.l.b16 %v809
  %v1503 = vunpack.c.h.b16 %v809
  %v1504 = vunpack.c.l.b16 %v810
  %v1505 = vunpack.c.h.b16 %v810
  %v1506 = vunpack.c.l.b16 %v811
  %v1507 = vunpack.c.h.b16 %v811
  %v1508 = vunpack.c.l.b16 %v812
  %v1509 = vunpack.c.h.b16 %v812
  %v1510 = vunpack.c.l.b16 %v813
  %v1511 = vunpack.c.h.b16 %v813
  %v1512 = vunpack.c.l.b16 %v814
  %v1513 = vunpack.c.h.b16 %v814
  %v1514 = vunpack.c.l.b16 %v815
  %v1515 = vunpack.c.h.b16 %v815
  %v1516 = vunpack.c.l.b16 %v816
  %v1517 = vunpack.c.h.b16 %v816
  %v1518 = vunpack.c.l.b16 %v817
  %v1519 = vunpack.c.h.b16 %v817
  %v1520 = vunpack.c.l.b16 %v818
  %v1521 = vunpack.c.h.b16 %v818
  %v1522 = vunpack.c.l.b16 %v819
  %v1523 = vunpack.c.h.b16 %v819
  %v1524 = vunpack.c.l.b16 %v820
  %v1525 = vunpack.c.h.b16 %v820
  %v1526 = vunpack.c.l.b16 %v821
  %v1527 = vunpack.c.h.b16 %v821
  %v1528 = vunpack.c.l.b16 %v822
  %v1529 = vunpack.c.h.b16 %v822
  %v1530 = vunpack.c.l.b16 %v823
  %v1531 = vunpack.c.h.b16 %v823
  %v1532 = vunpack.c.l.b16 %v824
  %v1533 = vunpack.c.h.b16 %v824
  %v1534 = vunpack.c.l.b16 %v825
  %v1535 = vunpack.c.h.b16 %v825
  %v1536 = vunpack.c.l.b16 %v826
  %v1537 = vunpack.c.h.b16 %v826
  %v1538 = vunpack.c.l.b16 %v827
  %v1539 = vunpack.c.h.b16 %v827
  %v1540 = vunpack.c.l.b16 %v828
  %v1541 = vunpack.c.h.b16 %v828
  %v1542 = vunpack.c.l.b16 %v829
  %v1543 = vunpack.c.h.b16 %v829
  %v1544 = vunpack.c.l.b16 %v830
  %v1545 = vunpack.c.h.b16 %v830
  %v1546 = vunpack.c.l.b16 %v831
  %v1547 = vunpack.c.h.b16 %v831
  %v1548 = vunpack.c.l.b16 %v832
  %v1549 = vunpack.c.h.b16 %v832
  %v1550 = vunpack.c.l.b16 %v833
  %v1551 = vunpack.c.h.b16 %v833
  %v1552 = vunpack.c.l.b16 %v834
  %v1553 = vunpack.c.h.b16 %v834
  %v1554 = vunpack.c.l.b16 %v835
  %v1555 = vunpack.c.h.b16 %v835
  %v1556 = vunpack.c.l.b16 %v836
  %v1557 = vunpack.c.h.b16 %v836
  %v1558 = vunpack.c.l.b16 %v837
  %v1559 = vunpack.c.h.b16 %v837
  %v1560 = vunpack.c.l.b16 %v838
  %v1561 = vunpack.c.h.b16 %v838
  %v1562 = vunpack.c.l.b16 %v839
  %v1563 = vunpack.c.h.b16 %v839
  %v1564 = vunpack.c.l.b16 %v840
  %v1565 = vunpack.c.h.b16 %v840
  %v1566 = vunpack.c.l.b16 %v841
  %v1567 = vunpack.c.h.b16 %v841
  %v1568 = vunpack.c.l.b16 %v842
  %v1569 = vunpack.c.h.b16 %v842
  %v1570 = vunpack.c.l.b16 %v843
  %v1571 = vunpack.c.h.b16 %v843
  %v1572 = vunpack.c.l.b16 %v844
  %v1573 = vunpack.c.h.b16 %v844
  %v1574 = vunpack.c.l.b16 %v845
  %v1575 = vunpack.c.h.b16 %v845
  %v1576 = vunpack.c.l.b16 %v846
  %v1577 = vunpack.c.h.b16 %v846
  %v1578 = vunpack.c.l.b16 %v847
  %v1579 = vunpack.c.h.b16 %v847
  %v1580 = vunpack.c.l.b16 %v848
  %v1581 = vunpack.c.h.b16 %v848
  %v1582 = vunpack.c.l.b16 %v849
  %v1583 = vunpack.c.h.b16 %v849
  %v1584 = vunpack.c.l.b16 %v850
  %v1585 = vunpack.c.h.b16 %v850
  %v1586 = vunpack.c.l.b16 %v851
  %v1587 = vunpack.c.h.b16 %v851
  %v1588 = vunpack.c.l.b16 %v852
  %v1589 = vunpack.c.h.b16 %v852
  %v1590 = vunpack.c.l.b16 %v853
  %v1591 = vunpack.c.h.b16 %v853
  %v1592 = vunpack.c.l.b16 %v854
  %v1593 = vunpack.c.h.b16 %v854
  %v1594 = vunpack.c.l.b16 %v855
  %v1595 = vunpack.c.h.b16 %v855
  %v1596 = vunpack.c.l.b16 %v856
  %v1597 = vunpack.c.h.b16 %v856
  %v1598 = vunpack.c.l.b16 %v857
  %v1599 = vunpack.c.h.b16 %v857
  %v1600 = vunpack.c.l.b16 %v858
  %v1601 = vunpack.c.h.b16 %v858
  %v1602 = vunpack.c.l.b16 %v859
  %v1603 = vunpack.c.h.b16 %v859
  %v1604 = vunpack.c.l.b16 %v860
  %v1605 = vunpack.c.h.b16 %v860
  %v1606 = vunpack.c.l.b16 %v861
  %v1607 = vunpack.c.h.b16 %v861
  %v1608 = vunpack.c.l.b16 %v862
  %v1609 = vunpack.c.h.b16 %v862
  %v1610 = vunpack.c.l.b16 %v863
  %v1611 = vunpack.c.h.b16 %v863
  %v1612 = vunpack.c.l.b16 %v864
  %v1613 = vunpack.c.h.b16 %v864
  %v1614 = vunpack.c.l.b16 %v865
  %v1615 = vunpack.c.h.b16 %v865
  %v1616 = vunpack.c.l.b16 %v866
  %v1617 = vunpack.c.h.b16 %v866
  %v1618 = vunpack.c.l.b16 %v867
  %v1619 = vunpack.c.h.b16 %v867
  %v1620 = vunpack.c.l.b16 %v868
  %v1621 = vunpack.c.h.b16 %v868
  %v1622 = vunpack.c.l.b16 %v869
  %v1623 = vunpack.c.h.b16 %v869
  %v1624 = vunpack.c.l.b16 %v870
  %v1625 = vunpack.c.h.b16 %v870
  %v1626 = vunpack.c.l.b16 %v871
  %v1627 = vunpack.c.h.b16 %v871
  %v1628 = vunpack.c.l.b16 %v872
  %v1629 = vunpack.c.h.b16 %v872
  %v1630 = vunpack.c.l.b16 %v873
  %v1631 = vunpack.c.h.b16 %v873
  %v1632 = vunpack.c.l.b16 %v874
  %v1633 = vunpack.c.h.b16 %v874
  %v1634 = vunpack.c.l.b16 %v875
  %v1635 = vunpack.c.h.b16 %v875
  %v1636 = vunpack.c.l.b16 %v876
  %v1637 = vunpack.c.h.b16 %v876
  %v1638 = vunpack.c.l.b16 %v877
  %v1639 = vunpack.c.h.b16 %v877
  %v1640 = vunpack.c.l.b16 %v878
  %v1641 = vunpack.c.h.b16 %v878
  %v1642 = vunpack.c.l.b16 %v879
  %v1643 = vunpack.c.h.b16 %v879
  %v1644 = vunpack.c.l.b16 %v880
  %v1645 = vunpack.c.h.b16 %v880
  %v1646 = vunpack.c.l.b16 %v881
  %v1647 = vunpack.c.h.b16 %v881
  %v1648 = vunpack.c.l.b16 %v882
  %v1649 = vunpack.c.h.b16 %v882
  %v1650 = vunpack.c.l.b16 %v883
  %v1651 = vunpack.c.h.b16 %v883
  %v1652 = vunpack.c.l.b16 %v884
  %v1653 = vunpack.c.h.b16 %v884
  %v1654 = vunpack.c.l.b16 %v885
  %v1655 = vunpack.c.h.b16 %v885
  %v1656 = vunpack.c.l.b16 %v886
  %v1657 = vunpack.c.h.b16 %v886
  %v1658 = vunpack.c.l.b16 %v887
  %v1659 = vunpack.c.h.b16 %v887
  %v1660 = vunpack.c.l.b16 %v888
  %v1661 = vunpack.c.h.b16 %v888
  %v1662 = vunpack.c.l.b16 %v889
  %v1663 = vunpack.c.h.b16 %v889
  %v1664 = vunpack.c.l.b16 %v890
  %v1665 = vunpack.c.h.b16 %v890
  %v1666 = vunpack.c.l.b16 %v891
  %v1667 = vunpack.c.h.b16 %v891
  %v1668 = vunpack.c.l.b16 %v892
  %v1669 = vunpack.c.h.b16 %v892
  %v1670 = vunpack.c.l.b16 %v893
  %v1671 = vunpack.c.h.b16 %v893
  %v1672 = vunpack.c.l.b16 %v894
  %v1673 = vunpack.c.h.b16 %v894
  %v1674 = vunpack.c.l.b16 %v895
  %v1675 = vunpack.c.h.b16 %v895
  %v1676 = vunpack.c.l.b16 %v896
  %v1677 = vunpack.c.h.b16 %v896
  %v1678 = vunpack.c.l.b16 %v897
  %v1679 = vunpack.c.h.b16 %v897
  %v1680 = vunpack.c.l.b16 %v898
  %v1681 = vunpack.c.h.b16 %v898
  %v1682 = vunpack.c.l.b16 %v899
  %v1683 = vunpack.c.h.b16 %v899
  %v1684 = vunpack.c.l.b16 %v900
  %v1685 = vunpack.c.h.b16 %v900
  %v1686 = vunpack.c.l.b16 %v901
  %v1687 = vunpack.c.h.b16 %v901
  %v1688 = vunpack.c.l.b16 %v902
  %v1689 = vunpack.c.h.b16 %v902
  %v1690 = vunpack.c.l.b16 %v903
  %v1691 = vunpack.c.h.b16 %v903
  %v1692 = vunpack.c.l.b16 %v904
  %v1693 = vunpack.c.h.b16 %v904
  %v1694 = vunpack.c.l.b16 %v905
  %v1695 = vunpack.c.h.b16 %v905
  %v1696 = vpack.c.b16 %v1188, %v1184
  %v1697 = vpack.c.b16 %v1189, %v1185
  %v1698 = vpack.c.b16 %v1190, %v1186
  %v1699 = vpack.c.b16 %v1191, %v1187
  %v1700 = vpack.c.b16 %v1196, %v1192
  %v1701 = vpack.c.b16 %v1197, %v1193
  %v1702 = vpack.c.b16 %v1198, %v1194
  %v1703 = vpack.c.b16 %v1199, %v1195
  %v1704 = vpack.c.b16 %v1204, %v1200
  %v1705 = vpack.c.b16 %v1205, %v1201
  %v1706 = vpack.c.b16 %v1206, %v1202
  %v1707 = vpack.c.b16 %v1207, %v1203
  %v1708 = vpack.c.b16 %v1212, %v1208
  %v1709 = vpack.c.b16 %v1213, %v1209
  %v1710 = vpack.c.b16 %v1214, %v1210
  %v1711 = vpack.c.b16 %v1215, %v1211
  %v1712 = vpack.c.b16 %v1220, %v1216
  %v1713 = vpack.c.b16 %v1221, %v1217
  %v1714 = vpack.c.b16 %v1222, %v1218
  %v1715 = vpack.c.b16 %v1223, %v1219
  %v1716 = vpack.c.b16 %v1228, %v1224
  %v1717 = vpack.c.b16 %v1229, %v1225
  %v1718 = vpack.c.b16 %v1230, %v1226
  %v1719 = vpack.c.b16 %v1231, %v1227
  %v1720 = vpack.c.b16 %v1236, %v1232
  %v1721 = vpack.c.b16 %v1237, %v1233
  %v1722 = vpack.c.b16 %v1238, %v1234
  %v1723 = vpack.c.b16 %v1239, %v1235
  %v1724 = vpack.c.b16 %v1244, %v1240
  %v1725 = vpack.c.b16 %v1245, %v1241
  %v1726 = vpack.c.b16 %v1246, %v1242
  %v1727 = vpack.c.b16 %v1247, %v1243
  %v1728 = vpack.c.b16 %v1252, %v1248
  %v1729 = vpack.c.b16 %v1253, %v1249
  %v1730 = vpack.c.b16 %v1254, %v1250
  %v1731 = vpack.c.b16 %v1255, %v1251
  %v1732 = vpack.c.b16 %v1260, %v1256
  %v1733 = vpack.c.b16 %v1261, %v1257
  %v1734 = vpack.c.b16 %v1262, %v1258
  %v1735 = vpack.c.b16 %v1263, %v1259
  %v1736 = vpack.c.b16 %v1268, %v1264
  %v1737 = vpack.c.b16 %v1269, %v1265
  %v1738 = vpack.c.b16 %v1270, %v1266
  %v1739 = vpack.c.b16 %v1271, %v1267
  %v1740 = vpack.c.b16 %v1276, %v1272
  %v1741 = vpack.c.b16 %v1277, %v1273
  %v1742 = vpack.c.b16 %v1278, %v1274
  %v1743 = vpack.c.b16 %v1279, %v1275
  %v1744 = vpack.c.b16 %v1284, %v1280
  %v1745 = vpack.c.b16 %v1285, %v1281
  %v1746 = vpack.c.b16 %v1286, %v1282
  %v1747 = vpack.c.b16 %v1287, %v1283
  %v1748 = vpack.c.b16 %v1292, %v1288
  %v1749 = vpack.c.b16 %v1293, %v1289
  %v1750 = vpack.c.b16 %v1294, %v1290
  %v1751 = vpack.c.b16 %v1295, %v1291
  %v1752 = vpack.c.b16 %v1300, %v1296
  %v1753 = vpack.c.b16 %v1301, %v1297
  %v1754 = vpack.c.b16 %v1302, %v1298
  %v1755 = vpack.c.b16 %v1303, %v1299
  %v1756 = vpack.c.b16 %v1308, %v1304
  %v1757 = vpack.c.b16 %v1309, %v1305
  %v1758 = vpack.c.b16 %v1310, %v1306
  %v1759 = vpack.c.b16 %v1311, %v1307
  %v1760 = vpack.c.b16 %v1316, %v1312
  %v1761 = vpack.c.b16 %v1317, %v1313
  %v1762 = vpack.c.b16 %v1318, %v1314
  %v1763 = vpack.c.b16 %v1319, %v1315
  %v1764 = vpack.c.b16 %v1324, %v1320
  %v1765 = vpack.c.b16 %v1325, %v1321
  %v1766 = vpack.c.b16 %v1326, %v1322
  %v1767 = vpack.c.b16 %v1327, %v1323
  %v1768 = vpack.c.b16 %v1332, %v1328
  %v1769 = vpack.c.b16 %v1333, %v1329
  %v1770 = vpack.c.b16 %v1334, %v1330
  %v1771 = vpack.c.b16 %v1335, %v1331
  %v1772 = vpack.c.b16 %v1340, %v1336
  %v1773 = vpack.c.b16 %v1341, %v1337
  %v1774 = vpack.c.b16 %v1342, %v1338
  %v1775 = vpack.c.b16 %v1343, %v1339
  %v1776 = vpack.c.b16 %v1348, %v1344
  %v1777 = vpack.c.b16 %v1349, %v1345
  %v1778 = vpack.c.b16 %v1350, %v1346
  %v1779 = vpack.c.b16 %v1351, %v1347
  %v1780 = vpack.c.b16 %v1356, %v1352
  %v1781 = vpack.c.b16 %v1357, %v1353
  %v1782 = vpack.c.b16 %v1358, %v1354
  %v1783 = vpack.c.b16 %v1359, %v1355
  %v1784 = vpack.c.b16 %v1364, %v1360
  %v1785 = vpack.c.b16 %v1365, %v1361
  %v1786 = vpack.c.b16 %v1366, %v1362
  %v1787 = vpack.c.b16 %v1367, %v1363
  %v1788 = vpack.c.b16 %v1372, %v1368
  %v1789 = vpack.c.b16 %v1373, %v1369
  %v1790 = vpack.c.b16 %v1374, %v1370
  %v1791 = vpack.c.b16 %v1375, %v1371
  %v1792 = vpack.c.b16 %v1380, %v1376
  %v1793 = vpack.c.b16 %v1381, %v1377
  %v1794 = vpack.c.b16 %v1382, %v1378
  %v1795 = vpack.c.b16 %v1383, %v1379
  %v1796 = vpack.c.b16 %v1388, %v1384
  %v1797 = vpack.c.b16 %v1389, %v1385
  %v1798 = vpack.c.b16 %v1390, %v1386
  %v1799 = vpack.c.b16 %v1391, %v1387
  %v1800 = vpack.c.b16 %v1396, %v1392
  %v1801 = vpack.c.b16 %v1397, %v1393
  %v1802 = vpack.c.b16 %v1398, %v1394
  %v1803 = vpack.c.b16 %v1399, %v1395
  %v1804 = vpack.c.b16 %v1404, %v1400
  %v1805 = vpack.c.b16 %v1405, %v1401
  %v1806 = vpack.c.b16 %v1406, %v1402
  %v1807 = vpack.c.b16 %v1407, %v1403
  %v1808 = vpack.c.b16 %v1412, %v1408
  %v1809 = vpack.c.b16 %v1413, %v1409
  %v1810 = vpack.c.b16 %v1414, %v1410
  %v1811 = vpack.c.b16 %v1415, %v1411
  %v1812 = vpack.c.b16 %v1420, %v1416
  %v1813 = vpack.c.b16 %v1421, %v1417
  %v1814 = vpack.c.b16 %v1422, %v1418
  %v1815 = vpack.c.b16 %v1423, %v1419
  %v1816 = vpack.c.b16 %v1428, %v1424
  %v1817 = vpack.c.b16 %v1429, %v1425
  %v1818 = vpack.c.b16 %v1430, %v1426
  %v1819 = vpack.c.b16 %v1431, %v1427
  %v1820 = vpack.c.b16 %v1436, %v1432
  %v1821 = vpack.c.b16 %v1437, %v1433
  %v1822 = vpack.c.b16 %v1438, %v1434
  %v1823 = vpack.c.b16 %v1439, %v1435
  %v1824 = vpack.c.b16 %v1444, %v1440
  %v1825 = vpack.c.b16 %v1445, %v1441
  %v1826 = vpack.c.b16 %v1446, %v1442
  %v1827 = vpack.c.b16 %v1447, %v1443
  %v1828 = vpack.c.b16 %v1452, %v1448
  %v1829 = vpack.c.b16 %v1453, %v1449
  %v1830 = vpack.c.b16 %v1454, %v1450
  %v1831 = vpack.c.b16 %v1455, %v1451
  %v1832 = vpack.c.b16 %v1460, %v1456
  %v1833 = vpack.c.b16 %v1461, %v1457
  %v1834 = vpack.c.b16 %v1462, %v1458
  %v1835 = vpack.c.b16 %v1463, %v1459
  %v1836 = vpack.c.b16 %v1468, %v1464
  %v1837 = vpack.c.b16 %v1469, %v1465
  %v1838 = vpack.c.b16 %v1470, %v1466
  %v1839 = vpack.c.b16 %v1471, %v1467
  %v1840 = vpack.c.b16 %v1476, %v1472
  %v1841 = vpack.c.b16 %v1477, %v1473
  %v1842 = vpack.c.b16 %v1478, %v1474
  %v1843 = vpack.c.b16 %v1479, %v1475
  %v1844 = vpack.c.b16 %v1484, %v1480
  %v1845 = vpack.c.b16 %v1485, %v1481
  %v1846 = vpack.c.b16 %v1486, %v1482
  %v1847 = vpack.c.b16 %v1487, %v1483
  %v1848 = vpack.c.b16 %v1492, %v1488
  %v1849 = vpack.c.b16 %v1493, %v1489
  %v1850 = vpack.c.b16 %v1494, %v1490
  %v1851 = vpack.c.b16 %v1495, %v1491
  %v1852 = vpack.c.b16 %v1500, %v1496
  %v1853 = vpack.c.b16 %v1501, %v1497
  %v1854 = vpack.c.b16 %v1502, %v1498
  %v1855 = vpack.c.b16 %v1503, %v1499
  %v1856 = vpack.c.b16 %v1508, %v1504
  %v1857 = vpack.c.b16 %v1509, %v1505
  %v1858 = vpack.c.b16 %v1510, %v1506
  %v1859 = vpack.c.b16 %v1511, %v1507
  %v1860 = vpack.c.b16 %v1516, %v1512
  %v1861 = vpack.c.b16 %v1517, %v1513
  %v1862 = vpack.c.b16 %v1518, %v1514
  %v1863 = vpack.c.b16 %v1519, %v1515
  %v1864 = vpack.c.b16 %v1524, %v1520
  %v1865 = vpack.c.b16 %v1525, %v1521
  %v1866 = vpack.c.b16 %v1526, %v1522
  %v1867 = vpack.c.b16 %v1527, %v1523
  %v1868 = vpack.c.b16 %v1532, %v1528
  %v1869 = vpack.c.b16 %v1533, %v1529
  %v1870 = vpack.c.b16 %v1534, %v1530
  %v1871 = vpack.c.b16 %v1535, %v1531
  %v1872 = vpack.c.b16 %v1540, %v1536
  %v1873 = vpack.c.b16 %v1541, %v1537
  %v1874 = vpack.c.b16 %v1542, %v1538
  %v1875 = vpack.c.b16 %v1543, %v1539
  %v1876 = vpack.c.b16 %v1548, %v1544
  %v1877 = vpack.c.b16 %v1549, %v1545
  %v1878 = vpack.c.b16 %v1550, %v1546
  %v1879 = vpack.c.b16 %v1551, %v1547
  %v1880 = vpack.c.b16 %v1556, %v1552
  %v1881 = vpack.c.b16 %v1557, %v1553
  %v1882 = vpack.c.b16 %v1558, %v1554
  %v1883 = vpack.c.b16 %v1559, %v1555
  %v1884 = vpack.c.b16 %v1564, %v1560
  %v1885 = vpack.c.b16 %v1565, %v1561
  %v1886 = vpack.c.b16 %v1566, %v1562
  %v1887 = vpack.c.b16 %v1567, %v1563
  %v1888 = vpack.c.b16 %v1572, %v1568
  %v1889 = vpack.c.b16 %v1573, %v1569
  %v1890 = vpack.c.b16 %v1574, %v1570
  %v1891 = vpack.c.b16 %v1575, %v1571
  %v1892 = vpack.c.b16 %v1580, %v1576
  %v1893 = vpack.c.b16 %v1581, %v1577
  %v1894 = vpack.c.b16 %v1582, %v1578
  %v1895 = vpack.c.b16 %v1583, %v1579
  %v1896 = vpack.c.b16 %v1588, %v1584
  %v1897 = vpack.c.b16 %v1589, %v1585
  %v1898 = vpack.c.b16 %v1590, %v1586
  %v1899 = vpack.c.b16 %v1591, %v1587
  %v1900 = vpack.c.b16 %v1596, %v1592
  %v1901 = vpack.c.b16 %v1597, %v1593
  %v1902 = vpack.c.b16 %v1598, %v1594
  %v1903 = vpack.c.b16 %v1599, %v1595
  %v1904 = vpack.c.b16 %v1604, %v1600
  %v1905 = vpack.c.b16 %v1605, %v1601
  %v1906 = vpack.c.b16 %v1606, %v1602
  %v1907 = vpack.c.b16 %v1607, %v1603
  %v1908 = vpack.c.b16 %v1612, %v1608
  %v1909 = vpack.c.b16 %v1613, %v1609
  %v1910 = vpack.c.b16 %v1614, %v1610
  %v1911 = vpack.c.b16 %v1615, %v1611
  %v1912 = vpack.c.b16 %v1620, %v1616
  %v1913 = vpack.c.b16 %v1621, %v1617
  %v1914 = vpack.c.b16 %v1622, %v1618
  %v1915 = vpack.c.b16 %v1623, %v1619
  %v1916 = vpack.c.b16 %v1628, %v1624
  %v1917 = vpack.c.b16 %v1629, %v1625
  %v1918 = vpack.c.b16 %v1630, %v1626
  %v1919 = vpack.c.b16 %v1631, %v1627
  %v1920 = vpack.c.b16 %v1636, %v1632
  %v1921 = vpack.c.b16 %v1637, %v1633
  %v1922 = vpack.c.b16 %v1638, %v1634
  %v1923 = vpack.c.b16 %v1639, %v1635
  %v1924 = vpack.c.b16 %v1644, %v1640
  %v1925 = vpack.c.b16 %v1645, %v1641
  %v1926 = vpack.c.b16 %v1646, %v1642
  %v1927 = vpack.c.b16 %v1647, %v1643
  %v1928 = vpack.c.b16 %v1652, %v1648
  %v1929 = vpack.c.b16 %v1653, %v1649
  %v1930 = vpack.c.b16 %v1654, %v1650
  %v1931 = vpack.c.b16 %v1655, %v1651
  %v1932 = vpack.c.b16 %v1660, %v1656
  %v1933 = vpack.c.b16 %v1661, %v1657
  %v1934 = vpack.c.b16 %v1662, %v1658
  %v1935 = vpack.c.b16 %v1663, %v1659
  %v1936 = vpack.c.b16 %v1668, %v1664
  %v1937 = vpack.c.b16 %v1669, %v1665
  %v1938 = vpack.c.b16 %v1670, %v1666
  %v1939 = vpack.c.b16 %v1671, %v1667
  %v1940 = vpack.c.b16 %v1676, %v1672
  %v1941 = vpack.c.b16 %v1677, %v1673
  %v1942 = vpack.c.b16 %v1678, %v1674
  %v1943 = vpack.c.b16 %v1679, %v1675
  %v1944 = vpack.c.b16 %v1684, %v1680
  %v1945 = vpack.c.b16 %v1685, %v1681
  %v1946 = vpack.c.b16 %v1686, %v1682
  %v1947 = vpack.c.b16 %v1687, %v1683
  %v1948 = vpack.c.b16 %v1692, %v1688
  %v1949 = vpack.c.b16 %v1693, %v1689
  %v1950 = vpack.c.b16 %v1694, %v1690
  %v1951 = vpack.c.b16 %v1695, %v1691
  %2208 = vmatprep.subr.bf16.mxu0 %v1725
  %2209 = vmatpush1.bf16.msra.mxu0 %v1724
  %2210 = vmatprep.subr.bf16.mxu0 %v1721
  %2211 = vmatpush1.bf16.msra.mxu0 %v1720
  %2212 = vmatprep.subr.bf16.mxu0 %v1717
  %2213 = vmatpush1.bf16.msra.mxu0 %v1716
  %2214 = vmatprep.subr.bf16.mxu0 %v1713
  %2215 = vmatpush1.bf16.msra.mxu0 %v1712
  %2216 = vmatprep.subr.bf16.mxu0 %v1709
  %2217 = vmatpush1.bf16.msra.mxu0 %v1708
  %2218 = vmatprep.subr.bf16.mxu0 %v1705
  %2219 = vmatpush1.bf16.msra.mxu0 %v1704
  %2220 = vmatprep.subr.bf16.mxu0 %v1701
  %2221 = vmatpush1.bf16.msra.mxu0 %v1700
  %2222 = vmatprep.subr.bf16.mxu0 %v1697
  %2223 = vmatpush1.bf16.msra.mxu0 %v1696
  %2224 = vmatprep.subr.bf16.mxu0 %v1757
  %2225 = vmatpush2.bf16.msra.mxu0 %v1756
  %2226 = vmatprep.subr.bf16.mxu0 %v1753
  %2227 = vmatpush2.bf16.msra.mxu0 %v1752
  %2228 = vmatprep.subr.bf16.mxu0 %v1749
  %2229 = vmatpush2.bf16.msra.mxu0 %v1748
  %2230 = vmatprep.subr.bf16.mxu0 %v1745
  %2231 = vmatpush2.bf16.msra.mxu0 %v1744
  %2232 = vmatprep.subr.bf16.mxu0 %v1741
  %2233 = vmatpush2.bf16.msra.mxu0 %v1740
  %2234 = vmatprep.subr.bf16.mxu0 %v1737
  %2235 = vmatpush2.bf16.msra.mxu0 %v1736
  %2236 = vmatprep.subr.bf16.mxu0 %v1733
  %2237 = vmatpush2.bf16.msra.mxu0 %v1732
  %2238 = vmatprep.subr.bf16.mxu0 %v1729
  %2239 = vmatpush2.bf16.msra.mxu0 %v1728
  %2240 = vmatprep.mubr.bf16.mxu0 %v643
  %2241 = vmatmul.mubr.bf16.gmra.mxu0 %v642
  %v2242 = vpop.f32.mrf.mxu0
  %v2243 = vadd.f32 %v911, %v2242
  %v2244 = vpop.f32.mrf.mxu0
  %v2245 = vadd.f32 %v915, %v2244
  %v2246 = vpop.f32.mrf.mxu0
  %v2247 = vadd.f32 %v911, %v2246
  %v2248 = vpop.f32.mrf.mxu0
  %v2249 = vadd.f32 %v915, %v2248
  %2250 = vdwg.mxu0
  %2251 = vmatprep.subr.bf16.mxu0 %v1789
  %2252 = vmatpush1.bf16.msra.mxu0 %v1788
  %2253 = vmatprep.subr.bf16.mxu0 %v1785
  %2254 = vmatpush1.bf16.msra.mxu0 %v1784
  %2255 = vmatprep.subr.bf16.mxu0 %v1781
  %2256 = vmatpush1.bf16.msra.mxu0 %v1780
  %2257 = vmatprep.subr.bf16.mxu0 %v1777
  %2258 = vmatpush1.bf16.msra.mxu0 %v1776
  %2259 = vmatprep.subr.bf16.mxu0 %v1773
  %2260 = vmatpush1.bf16.msra.mxu0 %v1772
  %2261 = vmatprep.subr.bf16.mxu0 %v1769
  %2262 = vmatpush1.bf16.msra.mxu0 %v1768
  %2263 = vmatprep.subr.bf16.mxu0 %v1765
  %2264 = vmatpush1.bf16.msra.mxu0 %v1764
  %2265 = vmatprep.subr.bf16.mxu0 %v1761
  %2266 = vmatpush1.bf16.msra.mxu0 %v1760
  %2267 = vmatprep.subr.bf16.mxu0 %v1821
  %2268 = vmatpush2.bf16.msra.mxu0 %v1820
  %2269 = vmatprep.subr.bf16.mxu0 %v1817
  %2270 = vmatpush2.bf16.msra.mxu0 %v1816
  %2271 = vmatprep.subr.bf16.mxu0 %v1813
  %2272 = vmatpush2.bf16.msra.mxu0 %v1812
  %2273 = vmatprep.subr.bf16.mxu0 %v1809
  %2274 = vmatpush2.bf16.msra.mxu0 %v1808
  %2275 = vmatprep.subr.bf16.mxu0 %v1805
  %2276 = vmatpush2.bf16.msra.mxu0 %v1804
  %2277 = vmatprep.subr.bf16.mxu0 %v1801
  %2278 = vmatpush2.bf16.msra.mxu0 %v1800
  %2279 = vmatprep.subr.bf16.mxu0 %v1797
  %2280 = vmatpush2.bf16.msra.mxu0 %v1796
  %2281 = vmatprep.subr.bf16.mxu0 %v1793
  %2282 = vmatpush2.bf16.msra.mxu0 %v1792
  %2283 = vmatprep.mubr.bf16.mxu0 %v645
  %2284 = vmatmul.mubr.bf16.gmra.mxu0 %v644
  %v2285 = vpop.f32.mrf.mxu0
  %v2286 = vadd.f32 %v2243, %v2285
  %v2287 = vpop.f32.mrf.mxu0
  %v2288 = vadd.f32 %v2245, %v2287
  %v2289 = vpop.f32.mrf.mxu0
  %v2290 = vadd.f32 %v2247, %v2289
  %v2291 = vpop.f32.mrf.mxu0
  %v2292 = vadd.f32 %v2249, %v2291
  %2293 = vdwg.mxu0
  %2294 = vmatprep.subr.bf16.mxu0 %v1853
  %2295 = vmatpush1.bf16.msra.mxu0 %v1852
  %2296 = vmatprep.subr.bf16.mxu0 %v1849
  %2297 = vmatpush1.bf16.msra.mxu0 %v1848
  %2298 = vmatprep.subr.bf16.mxu0 %v1845
  %2299 = vmatpush1.bf16.msra.mxu0 %v1844
  %2300 = vmatprep.subr.bf16.mxu0 %v1841
  %2301 = vmatpush1.bf16.msra.mxu0 %v1840
  %2302 = vmatprep.subr.bf16.mxu0 %v1837
  %2303 = vmatpush1.bf16.msra.mxu0 %v1836
  %2304 = vmatprep.subr.bf16.mxu0 %v1833
  %2305 = vmatpush1.bf16.msra.mxu0 %v1832
  %2306 = vmatprep.subr.bf16.mxu0 %v1829
  %2307 = vmatpush1.bf16.msra.mxu0 %v1828
  %2308 = vmatprep.subr.bf16.mxu0 %v1825
  %2309 = vmatpush1.bf16.msra.mxu0 %v1824
  %2310 = vmatprep.subr.bf16.mxu0 %v1885
  %2311 = vmatpush2.bf16.msra.mxu0 %v1884
  %2312 = vmatprep.subr.bf16.mxu0 %v1881
  %2313 = vmatpush2.bf16.msra.mxu0 %v1880
  %2314 = vmatprep.subr.bf16.mxu0 %v1877
  %2315 = vmatpush2.bf16.msra.mxu0 %v1876
  %2316 = vmatprep.subr.bf16.mxu0 %v1873
  %2317 = vmatpush2.bf16.msra.mxu0 %v1872
  %2318 = vmatprep.subr.bf16.mxu0 %v1869
  %2319 = vmatpush2.bf16.msra.mxu0 %v1868
  %2320 = vmatprep.subr.bf16.mxu0 %v1865
  %2321 = vmatpush2.bf16.msra.mxu0 %v1864
  %2322 = vmatprep.subr.bf16.mxu0 %v1861
  %2323 = vmatpush2.bf16.msra.mxu0 %v1860
  %2324 = vmatprep.subr.bf16.mxu0 %v1857
  %2325 = vmatpush2.bf16.msra.mxu0 %v1856
  %2326 = vmatprep.mubr.bf16.mxu0 %v647
  %2327 = vmatmul.mubr.bf16.gmra.mxu0 %v646
  %v2328 = vpop.f32.mrf.mxu0
  %v2329 = vadd.f32 %v2286, %v2328
  %v2330 = vpop.f32.mrf.mxu0
  %v2331 = vadd.f32 %v2288, %v2330
  %v2332 = vpop.f32.mrf.mxu0
  %v2333 = vadd.f32 %v2290, %v2332
  %v2334 = vpop.f32.mrf.mxu0
  %v2335 = vadd.f32 %v2292, %v2334
  %2336 = vdwg.mxu0
  %2337 = vmatprep.subr.bf16.mxu0 %v1917
  %2338 = vmatpush1.bf16.msra.mxu0 %v1916
  %2339 = vmatprep.subr.bf16.mxu0 %v1913
  %2340 = vmatpush1.bf16.msra.mxu0 %v1912
  %2341 = vmatprep.subr.bf16.mxu0 %v1909
  %2342 = vmatpush1.bf16.msra.mxu0 %v1908
  %2343 = vmatprep.subr.bf16.mxu0 %v1905
  %2344 = vmatpush1.bf16.msra.mxu0 %v1904
  %2345 = vmatprep.subr.bf16.mxu0 %v1901
  %2346 = vmatpush1.bf16.msra.mxu0 %v1900
  %2347 = vmatprep.subr.bf16.mxu0 %v1897
  %2348 = vmatpush1.bf16.msra.mxu0 %v1896
  %2349 = vmatprep.subr.bf16.mxu0 %v1893
  %2350 = vmatpush1.bf16.msra.mxu0 %v1892
  %2351 = vmatprep.subr.bf16.mxu0 %v1889
  %2352 = vmatpush1.bf16.msra.mxu0 %v1888
  %2353 = vmatprep.subr.bf16.mxu0 %v1949
  %2354 = vmatpush2.bf16.msra.mxu0 %v1948
  %2355 = vmatprep.subr.bf16.mxu0 %v1945
  %2356 = vmatpush2.bf16.msra.mxu0 %v1944
  %2357 = vmatprep.subr.bf16.mxu0 %v1941
  %2358 = vmatpush2.bf16.msra.mxu0 %v1940
  %2359 = vmatprep.subr.bf16.mxu0 %v1937
  %2360 = vmatpush2.bf16.msra.mxu0 %v1936
  %2361 = vmatprep.subr.bf16.mxu0 %v1933
  %2362 = vmatpush2.bf16.msra.mxu0 %v1932
  %2363 = vmatprep.subr.bf16.mxu0 %v1929
  %2364 = vmatpush2.bf16.msra.mxu0 %v1928
  %2365 = vmatprep.subr.bf16.mxu0 %v1925
  %2366 = vmatpush2.bf16.msra.mxu0 %v1924
  %2367 = vmatprep.subr.bf16.mxu0 %v1921
  %2368 = vmatpush2.bf16.msra.mxu0 %v1920
  %2369 = vmatprep.mubr.bf16.mxu0 %v649
  %2370 = vmatmul.mubr.bf16.gmra.mxu0 %v648
  %v2371 = vpop.f32.mrf.mxu0
  %v2372 = vadd.f32 %v2329, %v2371
  %v2373 = vpop.f32.mrf.mxu0
  %v2374 = vadd.f32 %v2331, %v2373
  %v2375 = vpop.f32.mrf.mxu0
  %v2376 = vadd.f32 %v2333, %v2375
  %v2377 = vpop.f32.mrf.mxu0
  %v2378 = vadd.f32 %v2335, %v2377
  %2379 = vdwg.mxu0
  %2380 = vmatprep.subr.bf16.mxu0 %v1727
  %2381 = vmatpush1.bf16.msra.mxu0 %v1726
  %2382 = vmatprep.subr.bf16.mxu0 %v1723
  %2383 = vmatpush1.bf16.msra.mxu0 %v1722
  %2384 = vmatprep.subr.bf16.mxu0 %v1719
  %2385 = vmatpush1.bf16.msra.mxu0 %v1718
  %2386 = vmatprep.subr.bf16.mxu0 %v1715
  %2387 = vmatpush1.bf16.msra.mxu0 %v1714
  %2388 = vmatprep.subr.bf16.mxu0 %v1711
  %2389 = vmatpush1.bf16.msra.mxu0 %v1710
  %2390 = vmatprep.subr.bf16.mxu0 %v1707
  %2391 = vmatpush1.bf16.msra.mxu0 %v1706
  %2392 = vmatprep.subr.bf16.mxu0 %v1703
  %2393 = vmatpush1.bf16.msra.mxu0 %v1702
  %2394 = vmatprep.subr.bf16.mxu0 %v1699
  %2395 = vmatpush1.bf16.msra.mxu0 %v1698
  %2396 = vmatprep.subr.bf16.mxu0 %v1759
  %2397 = vmatpush2.bf16.msra.mxu0 %v1758
  %2398 = vmatprep.subr.bf16.mxu0 %v1755
  %2399 = vmatpush2.bf16.msra.mxu0 %v1754
  %2400 = vmatprep.subr.bf16.mxu0 %v1751
  %2401 = vmatpush2.bf16.msra.mxu0 %v1750
  %2402 = vmatprep.subr.bf16.mxu0 %v1747
  %2403 = vmatpush2.bf16.msra.mxu0 %v1746
  %2404 = vmatprep.subr.bf16.mxu0 %v1743
  %2405 = vmatpush2.bf16.msra.mxu0 %v1742
  %2406 = vmatprep.subr.bf16.mxu0 %v1739
  %2407 = vmatpush2.bf16.msra.mxu0 %v1738
  %2408 = vmatprep.subr.bf16.mxu0 %v1735
  %2409 = vmatpush2.bf16.msra.mxu0 %v1734
  %2410 = vmatprep.subr.bf16.mxu0 %v1731
  %2411 = vmatpush2.bf16.msra.mxu0 %v1730
  %2412 = vmatprep.mubr.bf16.mxu0 %v643
  %2413 = vmatmul.mubr.bf16.gmra.mxu0 %v642
  %v2414 = vpop.f32.mrf.mxu0
  %v2415 = vadd.f32 %v919, %v2414
  %v2416 = vpop.f32.mrf.mxu0
  %v2417 = vadd.f32 %v923, %v2416
  %v2418 = vpop.f32.mrf.mxu0
  %v2419 = vadd.f32 %v919, %v2418
  %v2420 = vpop.f32.mrf.mxu0
  %v2421 = vadd.f32 %v923, %v2420
  %2422 = vdwg.mxu0
  %2423 = vmatprep.subr.bf16.mxu0 %v1791
  %2424 = vmatpush1.bf16.msra.mxu0 %v1790
  %2425 = vmatprep.subr.bf16.mxu0 %v1787
  %2426 = vmatpush1.bf16.msra.mxu0 %v1786
  %2427 = vmatprep.subr.bf16.mxu0 %v1783
  %2428 = vmatpush1.bf16.msra.mxu0 %v1782
  %2429 = vmatprep.subr.bf16.mxu0 %v1779
  %2430 = vmatpush1.bf16.msra.mxu0 %v1778
  %2431 = vmatprep.subr.bf16.mxu0 %v1775
  %2432 = vmatpush1.bf16.msra.mxu0 %v1774
  %2433 = vmatprep.subr.bf16.mxu0 %v1771
  %2434 = vmatpush1.bf16.msra.mxu0 %v1770
  %2435 = vmatprep.subr.bf16.mxu0 %v1767
  %2436 = vmatpush1.bf16.msra.mxu0 %v1766
  %2437 = vmatprep.subr.bf16.mxu0 %v1763
  %2438 = vmatpush1.bf16.msra.mxu0 %v1762
  %2439 = vmatprep.subr.bf16.mxu0 %v1823
  %2440 = vmatpush2.bf16.msra.mxu0 %v1822
  %2441 = vmatprep.subr.bf16.mxu0 %v1819
  %2442 = vmatpush2.bf16.msra.mxu0 %v1818
  %2443 = vmatprep.subr.bf16.mxu0 %v1815
  %2444 = vmatpush2.bf16.msra.mxu0 %v1814
  %2445 = vmatprep.subr.bf16.mxu0 %v1811
  %2446 = vmatpush2.bf16.msra.mxu0 %v1810
  %2447 = vmatprep.subr.bf16.mxu0 %v1807
  %2448 = vmatpush2.bf16.msra.mxu0 %v1806
  %2449 = vmatprep.subr.bf16.mxu0 %v1803
  %2450 = vmatpush2.bf16.msra.mxu0 %v1802
  %2451 = vmatprep.subr.bf16.mxu0 %v1799
  %2452 = vmatpush2.bf16.msra.mxu0 %v1798
  %2453 = vmatprep.subr.bf16.mxu0 %v1795
  %2454 = vmatpush2.bf16.msra.mxu0 %v1794
  %2455 = vmatprep.mubr.bf16.mxu0 %v645
  %2456 = vmatmul.mubr.bf16.gmra.mxu0 %v644
  %v2457 = vpop.f32.mrf.mxu0
  %v2458 = vadd.f32 %v2415, %v2457
  %v2459 = vpop.f32.mrf.mxu0
  %v2460 = vadd.f32 %v2417, %v2459
  %v2461 = vpop.f32.mrf.mxu0
  %v2462 = vadd.f32 %v2419, %v2461
  %v2463 = vpop.f32.mrf.mxu0
  %v2464 = vadd.f32 %v2421, %v2463
  %2465 = vdwg.mxu0
  %2466 = vmatprep.subr.bf16.mxu0 %v1855
  %2467 = vmatpush1.bf16.msra.mxu0 %v1854
  %2468 = vmatprep.subr.bf16.mxu0 %v1851
  %2469 = vmatpush1.bf16.msra.mxu0 %v1850
  %2470 = vmatprep.subr.bf16.mxu0 %v1847
  %2471 = vmatpush1.bf16.msra.mxu0 %v1846
  %2472 = vmatprep.subr.bf16.mxu0 %v1843
  %2473 = vmatpush1.bf16.msra.mxu0 %v1842
  %2474 = vmatprep.subr.bf16.mxu0 %v1839
  %2475 = vmatpush1.bf16.msra.mxu0 %v1838
  %2476 = vmatprep.subr.bf16.mxu0 %v1835
  %2477 = vmatpush1.bf16.msra.mxu0 %v1834
  %2478 = vmatprep.subr.bf16.mxu0 %v1831
  %2479 = vmatpush1.bf16.msra.mxu0 %v1830
  %2480 = vmatprep.subr.bf16.mxu0 %v1827
  %2481 = vmatpush1.bf16.msra.mxu0 %v1826
  %2482 = vmatprep.subr.bf16.mxu0 %v1887
  %2483 = vmatpush2.bf16.msra.mxu0 %v1886
  %2484 = vmatprep.subr.bf16.mxu0 %v1883
  %2485 = vmatpush2.bf16.msra.mxu0 %v1882
  %2486 = vmatprep.subr.bf16.mxu0 %v1879
  %2487 = vmatpush2.bf16.msra.mxu0 %v1878
  %2488 = vmatprep.subr.bf16.mxu0 %v1875
  %2489 = vmatpush2.bf16.msra.mxu0 %v1874
  %2490 = vmatprep.subr.bf16.mxu0 %v1871
  %2491 = vmatpush2.bf16.msra.mxu0 %v1870
  %2492 = vmatprep.subr.bf16.mxu0 %v1867
  %2493 = vmatpush2.bf16.msra.mxu0 %v1866
  %2494 = vmatprep.subr.bf16.mxu0 %v1863
  %2495 = vmatpush2.bf16.msra.mxu0 %v1862
  %2496 = vmatprep.subr.bf16.mxu0 %v1859
  %2497 = vmatpush2.bf16.msra.mxu0 %v1858
  %2498 = vmatprep.mubr.bf16.mxu0 %v647
  %2499 = vmatmul.mubr.bf16.gmra.mxu0 %v646
  %v2500 = vpop.f32.mrf.mxu0
  %v2501 = vadd.f32 %v2458, %v2500
  %v2502 = vpop.f32.mrf.mxu0
  %v2503 = vadd.f32 %v2460, %v2502
  %v2504 = vpop.f32.mrf.mxu0
  %v2505 = vadd.f32 %v2462, %v2504
  %v2506 = vpop.f32.mrf.mxu0
  %v2507 = vadd.f32 %v2464, %v2506
  %2508 = vdwg.mxu0
  %2509 = vmatprep.subr.bf16.mxu0 %v1919
  %2510 = vmatpush1.bf16.msra.mxu0 %v1918
  %2511 = vmatprep.subr.bf16.mxu0 %v1915
  %2512 = vmatpush1.bf16.msra.mxu0 %v1914
  %2513 = vmatprep.subr.bf16.mxu0 %v1911
  %2514 = vmatpush1.bf16.msra.mxu0 %v1910
  %2515 = vmatprep.subr.bf16.mxu0 %v1907
  %2516 = vmatpush1.bf16.msra.mxu0 %v1906
  %2517 = vmatprep.subr.bf16.mxu0 %v1903
  %2518 = vmatpush1.bf16.msra.mxu0 %v1902
  %2519 = vmatprep.subr.bf16.mxu0 %v1899
  %2520 = vmatpush1.bf16.msra.mxu0 %v1898
  %2521 = vmatprep.subr.bf16.mxu0 %v1895
  %2522 = vmatpush1.bf16.msra.mxu0 %v1894
  %2523 = vmatprep.subr.bf16.mxu0 %v1891
  %2524 = vmatpush1.bf16.msra.mxu0 %v1890
  %2525 = vmatprep.subr.bf16.mxu0 %v1951
  %2526 = vmatpush2.bf16.msra.mxu0 %v1950
  %2527 = vmatprep.subr.bf16.mxu0 %v1947
  %2528 = vmatpush2.bf16.msra.mxu0 %v1946
  %2529 = vmatprep.subr.bf16.mxu0 %v1943
  %2530 = vmatpush2.bf16.msra.mxu0 %v1942
  %2531 = vmatprep.subr.bf16.mxu0 %v1939
  %2532 = vmatpush2.bf16.msra.mxu0 %v1938
  %2533 = vmatprep.subr.bf16.mxu0 %v1935
  %2534 = vmatpush2.bf16.msra.mxu0 %v1934
  %2535 = vmatprep.subr.bf16.mxu0 %v1931
  %2536 = vmatpush2.bf16.msra.mxu0 %v1930
  %2537 = vmatprep.subr.bf16.mxu0 %v1927
  %2538 = vmatpush2.bf16.msra.mxu0 %v1926
  %2539 = vmatprep.subr.bf16.mxu0 %v1923
  %2540 = vmatpush2.bf16.msra.mxu0 %v1922
  %2541 = vmatprep.mubr.bf16.mxu0 %v649
  %2542 = vmatmul.mubr.bf16.gmra.mxu0 %v648
  %v2543 = vpop.f32.mrf.mxu0
  %v2544 = vadd.f32 %v2501, %v2543
  %v2545 = vpop.f32.mrf.mxu0
  %v2546 = vadd.f32 %v2503, %v2545
  %v2547 = vpop.f32.mrf.mxu0
  %v2548 = vadd.f32 %v2505, %v2547
  %v2549 = vpop.f32.mrf.mxu0
  %v2550 = vadd.f32 %v2507, %v2549
  %2551 = vdwg.mxu0
  %v2552 = vpack.c.bf16 %v2376, %v2372
  %v2553 = vpack.c.bf16 %v2378, %v2374
  %v2554 = vpack.c.bf16 %v2548, %v2544
  %v2555 = vpack.c.bf16 %v2550, %v2546
  %v2556 = vtanh.bf16.pop %v2552
  %v2557 = vtanh.bf16.pop %v2553
  %v2558 = vtanh.bf16.pop %v2554
  %v2559 = vtanh.bf16.pop %v2555
  %v2560 = vunpack.c.l.bf16 %v2556
  %v2561 = vunpack.c.l.bf16 %v2557
  %v2562 = vunpack.c.l.bf16 %v2558
  %v2563 = vunpack.c.l.bf16 %v2559
  %v2564 = vunpack.c.h.bf16 %v2556
  %v2565 = vunpack.c.h.bf16 %v2557
  %v2566 = vunpack.c.h.bf16 %v2558
  %v2567 = vunpack.c.h.bf16 %v2559
  %v2568 = vld [vmem:[%s5] sm:$0xf]
  %v2570 = vlaneseq
  %v2571 = vshrl.u32 %v2570, 7
  %v2572 = vsub.s32 0, %v2571
  %v2573 = vrot.slane %v2568, %v2572
  %v2574 = vlaneseq
  %v2575 = vshrl.u32 %v2574, 7
  %v2576 = vsub.s32 1, %v2575
  %v2577 = vrot.slane %v2568, %v2576
  %v2578 = vlaneseq
  %v2579 = vshrl.u32 %v2578, 7
  %v2580 = vsub.s32 2, %v2579
  %v2581 = vrot.slane %v2568, %v2580
  %v2582 = vlaneseq
  %v2583 = vshrl.u32 %v2582, 7
  %v2584 = vsub.s32 3, %v2583
  %v2585 = vrot.slane %v2568, %v2584
  %v2590 = vmul.f32 %v2560, %v2573
  %v2591 = vmul.f32 %v2561, %v2577
  %v2592 = vmul.f32 %v2562, %v2581
  %v2593 = vmul.f32 %v2563, %v2585
  %v2594 = vmul.f32 %v2564, %v2573
  %v2595 = vmul.f32 %v2565, %v2577
  %v2596 = vmul.f32 %v2566, %v2581
  %v2597 = vmul.f32 %v2567, %v2585
  %v2598 = vadd.f32 %v2590, %v2591
  %v2599 = vadd.f32 %v2598, %v2592
  %v2600 = vadd.f32 %v2599, %v2593
  %2601 = vadd.xlane.f32.xlu0 %v2600
  %v2602 = vpop.xlane.xlu0 %2601
  %v2603 = vadd.f32 %v2594, %v2595
  %v2604 = vadd.f32 %v2603, %v2596
  %v2605 = vadd.f32 %v2604, %v2597
  %2606 = vadd.xlane.f32.xlu0 %v2605
  %v2607 = vpop.xlane.xlu0 %2606
  %s2608 = sld [smem:[#allocation2]]
  %v2609 = vstv %s2608
  %v2610 = vadd.f32 %v2602, %v2609
  %v2611 = vadd.f32 %v2607, %v2609
  %vm2612 = vcmask 7168
  %2613 = vst.msk [vmem:[%s7] sm:$0xff] %vm2612, %v2610
  %2614 = vst.msk [vmem:[%s7 + $0x8] sm:$0xff] %vm2612, %v2611
  // Predicated region
  $region30: #{critic_forward.1} parent=0 // pred_check
    _
  $region31: #{critic_forward.1} parent=0 // pred_check_branch
    %2616 = sbr.rel (0) target = $region33
  $region32: #{critic_forward.1} parent=0 // pred_region
    _
  $region33: #{critic_forward.1} parent=0 // pred_fallthru
    _
  // Predicated region
  $region34: #{critic_forward.1} parent=0 // pred_check
    _
  $region35: #{critic_forward.1} parent=0 // pred_check_branch
    %2618 = sbr.rel (0) target = $region37
  $region36: #{critic_forward.1} parent=0 // pred_region
    _
  $region37: #{critic_forward.1} parent=0 // pred_fallthru
    _

</llo_original>
